<compile_context>
chip_gen: v7x
topology: tpu7x:2x2x1
jax: 0.10.0
libtpu: 0.0.40
codegen_flags: <defaults>
</compile_context>

<pallas_src>
import functools

import jax
import jax.numpy as jnp
from jax import lax
from jax.experimental import pallas as pl
from jax.experimental.pallas import tpu as pltpu

_LANE = 128


def _round_up(n, m):
    return ((n + m - 1) // m) * m


# ---------------------------------------------------------------------------
# Pallas kernels
# ---------------------------------------------------------------------------

def _conv_relu_pool_kernel(p_ref, w_ref, b_ref, o_ref):
    """Fused conv (matmul over im2col patches) + bias + ReLU + 2x2 max-pool.

    p_ref: (4, K, tile_m)   im2col patches, one slab per 2x2-pool quadrant
    w_ref: (C_out, K)       conv weight (resident across the grid)
    b_ref: (C_out, 1)       conv bias
    o_ref: (C_out, tile_m)  pooled activations, lane-dense along tile_m
    """
    w = w_ref[...]
    b = b_ref[...]
    acc = None
    for q in range(4):                       # unrolled: 4 pool-window quadrants
        z = jnp.dot(w, p_ref[q, :, :], preferred_element_type=jnp.float32)
        z = jnp.maximum(z + b, 0.0)          # conv bias + ReLU
        acc = z if acc is None else jnp.maximum(acc, z)   # 2x2 max-pool
    o_ref[...] = acc.astype(o_ref.dtype)


def _mlp_softmax_kernel(x_ref, w1_ref, b1_ref, w2_ref, b2_ref, w3_ref, b3_ref,
                        o_ref):
    """Fused fc1+ReLU -> fc2+ReLU -> fc3 -> softmax in (feature, batch) layout.

    x_ref: (192, tile_b)   w1: (84, 192)  w2: (42, 84)  w3: (3, 42)
    o_ref: (3, tile_b)     lane-dense along the batch tile
    """
    h = jnp.dot(w1_ref[...], x_ref[...], preferred_element_type=jnp.float32)
    h = jnp.maximum(h + b1_ref[...], 0.0)
    h = jnp.dot(w2_ref[...], h, preferred_element_type=jnp.float32)
    h = jnp.maximum(h + b2_ref[...], 0.0)
    z = jnp.dot(w3_ref[...], h, preferred_element_type=jnp.float32)
    z = z + b3_ref[...]
    # Softmax over the 3 class rows, written with static row slices so all ops
    # stay lane-wise (no cross-sublane reductions needed).
    z0, z1, z2 = z[0:1, :], z[1:2, :], z[2:3, :]
    m = jnp.maximum(jnp.maximum(z0, z1), z2)
    e0 = jnp.exp(z0 - m)
    e1 = jnp.exp(z1 - m)
    e2 = jnp.exp(z2 - m)
    inv = 1.0 / (e0 + e1 + e2)
    o_ref[0:1, :] = (e0 * inv).astype(o_ref.dtype)
    o_ref[1:2, :] = (e1 * inv).astype(o_ref.dtype)
    o_ref[2:3, :] = (e2 * inv).astype(o_ref.dtype)


# ---------------------------------------------------------------------------
# pallas_call wrappers
# ---------------------------------------------------------------------------

def _conv_relu_pool(p, w, b, *, tile_m=512):
    """p: (4, K, M) patches; w: (C, K); b: (C, 1) -> (C, M) pooled activations."""
    _, k, m = p.shape
    c = w.shape[0]
    tile_m = min(tile_m, _round_up(m, _LANE))
    m_pad = _round_up(m, tile_m)
    if m_pad != m:
        p = jnp.pad(p, ((0, 0), (0, 0), (0, m_pad - m)))
    grid = (m_pad // tile_m,)
    out = pl.pallas_call(
        _conv_relu_pool_kernel,
        out_shape=jax.ShapeDtypeStruct((c, m_pad), p.dtype),
        grid_spec=pltpu.PrefetchScalarGridSpec(
            num_scalar_prefetch=0,
            grid=grid,
            in_specs=[
                pl.BlockSpec((4, k, tile_m), lambda i: (0, 0, i)),
                pl.BlockSpec((c, k), lambda i: (0, 0)),      # resident weight
                pl.BlockSpec((c, 1), lambda i: (0, 0)),      # resident bias
            ],
            out_specs=pl.BlockSpec((c, tile_m), lambda i: (0, i)),
        ),
        compiler_params=pltpu.CompilerParams(
            dimension_semantics=("parallel",),
        ),
    )(p, w, b)
    return out[:, :m]


def _mlp_softmax(xt, w1, b1, w2, b2, w3, b3, *, tile_b=128):
    """xt: (D, B) transposed features -> (3, B) class probabilities."""
    d_in, bsz = xt.shape
    n_cls = w3.shape[0]
    assert n_cls == 3, "kernel is specialized for the 3-class head"
    tile_b = min(tile_b, _round_up(bsz, _LANE))
    b_pad = _round_up(bsz, tile_b)
    if b_pad != bsz:
        xt = jnp.pad(xt, ((0, 0), (0, b_pad - bsz)))
    grid = (b_pad // tile_b,)
    out = pl.pallas_call(
        _mlp_softmax_kernel,
        out_shape=jax.ShapeDtypeStruct((n_cls, b_pad), xt.dtype),
        grid_spec=pltpu.PrefetchScalarGridSpec(
            num_scalar_prefetch=0,
            grid=grid,
            in_specs=[
                pl.BlockSpec((d_in, tile_b), lambda i: (0, i)),
                pl.BlockSpec(w1.shape, lambda i: (0, 0)),
                pl.BlockSpec(b1.shape, lambda i: (0, 0)),
                pl.BlockSpec(w2.shape, lambda i: (0, 0)),
                pl.BlockSpec(b2.shape, lambda i: (0, 0)),
                pl.BlockSpec(w3.shape, lambda i: (0, 0)),
                pl.BlockSpec(b3.shape, lambda i: (0, 0)),
            ],
            out_specs=pl.BlockSpec((n_cls, tile_b), lambda i: (0, i)),
        ),
        compiler_params=pltpu.CompilerParams(
            dimension_semantics=("parallel",),
        ),
    )(xt, w1, b1, w2, b2, w3, b3)
    return out[:, :bsz]


# ---------------------------------------------------------------------------
# Wrapper-side layout plumbing (im2col / pool-quadrant extraction)
# ---------------------------------------------------------------------------

def _extract_pooled_patches(x, ksize):
    """x: (B, C, H, W) -> (4, C*k*k, B*ph*pw) im2col patches, grouped by the
    2x2 max-pool quadrant of the (VALID, stride-1) conv output they feed."""
    bsz, c, h, w = x.shape
    oh, ow = h - ksize + 1, w - ksize + 1
    ph, pw = oh // 2, ow // 2
    kk = ksize * ksize
    quads = []
    for di in range(2):
        for dj in range(2):
            taps = [
                x[:, :, di + ki:di + ki + 2 * ph:2, dj + kj:dj + kj + 2 * pw:2]
                for ki in range(ksize) for kj in range(ksize)
            ]
            pq = jnp.stack(taps, axis=2)                  # (B, C, k*k, ph, pw)
            pq = pq.reshape(bsz, c * kk, ph, pw)          # K = c*k*k + ki*k + kj
            pq = pq.transpose(1, 0, 2, 3).reshape(c * kk, bsz * ph * pw)
            quads.append(pq)
    return jnp.stack(quads, axis=0)                       # (4, K, B*ph*pw)


# ---------------------------------------------------------------------------
# Full forward pass
# ---------------------------------------------------------------------------

@functools.partial(jax.jit, static_argnames=("conv_tile", "head_tile"))
def gate_cnn_fashion_softmax(params, x, *, conv_tile=512, head_tile=128):
    """Pallas forward of GateCNNFahsionSoftmax.  x: (B, 1, 28, 28) -> (B, 3)."""
    bsz = x.shape[0]
    dt = x.dtype

    # conv1 (1->6, 5x5) + ReLU + 2x2 max-pool  -> (6, B*12*12), lane-dense
    p1 = _extract_pooled_patches(x, 5)                          # (4, 25, B*144)
    w1 = params["conv1_w"].reshape(6, 25).astype(dt)
    b1 = params["conv1_b"].reshape(6, 1).astype(dt)
    f1 = _conv_relu_pool(p1, w1, b1, tile_m=conv_tile)          # (6, B*144)
    f1 = f1.reshape(6, bsz, 12, 12).transpose(1, 0, 2, 3)       # (B, 6, 12, 12)

    # conv2 (6->12, 5x5) + ReLU + 2x2 max-pool -> (12, B*4*4)
    p2 = _extract_pooled_patches(f1, 5)                         # (4, 150, B*16)
    w2 = params["conv2_w"].reshape(12, 150).astype(dt)
    b2 = params["conv2_b"].reshape(12, 1).astype(dt)
    f2 = _conv_relu_pool(p2, w2, b2, tile_m=conv_tile)          # (12, B*16)

    # Flatten to torch's x.view(B, C*H*W) order, kept transposed: (192, B).
    # TODO(synk): original forward calls x.view(-1, 16*5*5) which is
    # inconsistent with fc1 (in_features = 12*4*4 = 192); implemented the
    # intended 12*4*4 flatten so the layer shapes compose.
    xt = f2.reshape(12, bsz, 4, 4).transpose(0, 2, 3, 1).reshape(192, bsz)

    # fc1+ReLU -> fc2+ReLU -> fc3 -> softmax, fused in one Pallas kernel.
    probs_t = _mlp_softmax(
        xt,
        params["fc1_w"].astype(dt), params["fc1_b"].reshape(84, 1).astype(dt),
        params["fc2_w"].astype(dt), params["fc2_b"].reshape(42, 1).astype(dt),
        params["fc3_w"].astype(dt), params["fc3_b"].reshape(3, 1).astype(dt),
        tile_b=head_tile,
    )                                                           # (3, B)
    return probs_t.T                                            # (B, 3)


# ---------------------------------------------------------------------------
# Params + plain-JAX reference
# ---------------------------------------------------------------------------

def init_params(key, dtype=jnp.float32):
    """torch-default init: U(-k, k) with k = 1/sqrt(fan_in)."""
    def uinit(k, fan_in, wshape, bshape):
        kw, kb = jax.random.split(k)
        bound = 1.0 / (fan_in ** 0.5)
        w = jax.random.uniform(kw, wshape, dtype, minval=-bound, maxval=bound)
        b = jax.random.uniform(kb, bshape, dtype, minval=-bound, maxval=bound)
        return w, b

    ks = jax.random.split(key, 5)
    conv1_w, conv1_b = uinit(ks[0], 1 * 5 * 5, (6, 1, 5, 5), (6,))
    conv2_w, conv2_b = uinit(ks[1], 6 * 5 * 5, (12, 6, 5, 5), (12,))
    fc1_w, fc1_b = uinit(ks[2], 192, (84, 192), (84,))
    fc2_w, fc2_b = uinit(ks[3], 84, (42, 84), (42,))
    fc3_w, fc3_b = uinit(ks[4], 42, (3, 42), (3,))
    return dict(conv1_w=conv1_w, conv1_b=conv1_b,
                conv2_w=conv2_w, conv2_b=conv2_b,
                fc1_w=fc1_w, fc1_b=fc1_b,
                fc2_w=fc2_w, fc2_b=fc2_b,
                fc3_w=fc3_w, fc3_b=fc3_b)


def reference_forward(params, x):
    """Plain-JAX (XLA) reference matching the torch forward semantics."""
    dn = ("NCHW", "OIHW", "NCHW")

    def conv_relu_pool(h, w, b):
        h = lax.conv_general_dilated(h, w, (1, 1), "VALID", dimension_numbers=dn)
        h = jnp.maximum(h + b[None, :, None, None], 0.0)
        return lax.reduce_window(h, -jnp.inf, lax.max,
                                 (1, 1, 2, 2), (1, 1, 2, 2), "VALID")

    h = conv_relu_pool(x, params["conv1_w"], params["conv1_b"])
    h = conv_relu_pool(h, params["conv2_w"], params["conv2_b"])
    h = h.reshape(h.shape[0], -1)
    h = jnp.maximum(jnp.dot(h, params["fc1_w"].T) + params["fc1_b"], 0.0)
    h = jnp.maximum(jnp.dot(h, params["fc2_w"].T) + params["fc2_b"], 0.0)
    z = jnp.dot(h, params["fc3_w"].T) + params["fc3_b"]
    return jax.nn.softmax(z, axis=-1)


if __name__ == "__main__":
    key = jax.random.PRNGKey(0)
    k_x, k_p = jax.random.split(key)

    batch = 8
    x = jax.random.normal(k_x, (batch, 1, 28, 28), jnp.float32)
    params = init_params(k_p)

    y = gate_cnn_fashion_softmax(params, x, conv_tile=512, head_tile=128)
    y = jax.block_until_ready(y)

    y_ref = reference_forward(params, x)

    assert y.shape == (batch, 3), y.shape
    # Each row is a softmax distribution over 3 classes.
    assert jnp.allclose(jnp.sum(y, axis=-1), 1.0, atol=1e-5)
    # Tolerance accounts for MXU default f32 matmul precision differing
    # slightly between the Pallas kernels and the XLA reference.
    assert jnp.allclose(y, y_ref, atol=2e-3, rtol=2e-3), \
        float(jnp.max(jnp.abs(y - y_ref)))

    print("KERNEL_OK")
</pallas_src>

<mosaic_0001>
module attributes {stable_mosaic.version = 11 : i64} {
  func.func @_conv_relu_pool_kernel(%arg0: i32, %arg1: memref<4x25x512xf32, #tpu.memory_space<vmem>>, %arg2: memref<6x25xf32, #tpu.memory_space<vmem>>, %arg3: memref<6x1xf32, #tpu.memory_space<vmem>>, %arg4: memref<6x512xf32, #tpu.memory_space<vmem>>) attributes {dimension_semantics = [#tpu.dimension_semantics<parallel>], iteration_bounds = array<i64: 3>, scalar_prefetch = 0 : i64, scratch_operands = 0 : i64, tpu.core_type = #tpu.core_type<tc>, window_params = [{transform_indices = @transform_0, window_bounds = array<i64: 4, 25, 512>}, {pipeline_mode = #tpu.pipeline_mode<synchronous>, transform_indices = @transform_1, window_bounds = array<i64: 6, 25>}, {pipeline_mode = #tpu.pipeline_mode<synchronous>, transform_indices = @transform_2, window_bounds = array<i64: 6, 1>}, {transform_indices = @transform_3, window_bounds = array<i64: 6, 512>}]} {
    %c0 = arith.constant 0 : index
    %c0_0 = arith.constant 0 : index
    %0 = vector.load %arg2[%c0, %c0_0] : memref<6x25xf32, #tpu.memory_space<vmem>>, vector<6x25xf32>
    %c0_1 = arith.constant 0 : index
    %c0_2 = arith.constant 0 : index
    %1 = vector.load %arg3[%c0_1, %c0_2] : memref<6x1xf32, #tpu.memory_space<vmem>>, vector<6x1xf32>
    %c0_3 = arith.constant 0 : index
    %c0_4 = arith.constant 0 : index
    %c0_5 = arith.constant 0 : index
    %2 = vector.load %arg1[%c0_3, %c0_4, %c0_5] : memref<4x25x512xf32, #tpu.memory_space<vmem>>, vector<1x25x512xf32>
    %3 = vector.shape_cast %2 : vector<1x25x512xf32> to vector<25x512xf32>
    %cst = arith.constant dense<0.000000e+00> : vector<6x512xf32>
    %4 = tpu.matmul %0, %3, %cst {dimension_numbers = #tpu.dot_dimension_numbers<[1], [0], [0], [1], [0, 0, 1, 1], [], []>} : vector<6x25xf32>, vector<25x512xf32>, vector<6x512xf32> -> vector<6x512xf32>
    %5 = vector.broadcast %1 : vector<6x1xf32> to vector<6x512xf32>
    %6 = arith.addf %4, %5 : vector<6x512xf32>
    %cst_6 = arith.constant 0.000000e+00 : f32
    %7 = vector.broadcast %cst_6 : f32 to vector<6x512xf32>
    %8 = arith.maximumf %6, %7 : vector<6x512xf32>
    %c1 = arith.constant 1 : index
    %c0_7 = arith.constant 0 : index
    %c0_8 = arith.constant 0 : index
    %9 = vector.load %arg1[%c1, %c0_7, %c0_8] : memref<4x25x512xf32, #tpu.memory_space<vmem>>, vector<1x25x512xf32>
    %10 = vector.shape_cast %9 : vector<1x25x512xf32> to vector<25x512xf32>
    %cst_9 = arith.constant dense<0.000000e+00> : vector<6x512xf32>
    %11 = tpu.matmul %0, %10, %cst_9 {dimension_numbers = #tpu.dot_dimension_numbers<[1], [0], [0], [1], [0, 0, 1, 1], [], []>} : vector<6x25xf32>, vector<25x512xf32>, vector<6x512xf32> -> vector<6x512xf32>
    %12 = vector.broadcast %1 : vector<6x1xf32> to vector<6x512xf32>
    %13 = arith.addf %11, %12 : vector<6x512xf32>
    %cst_10 = arith.constant 0.000000e+00 : f32
    %14 = vector.broadcast %cst_10 : f32 to vector<6x512xf32>
    %15 = arith.maximumf %13, %14 : vector<6x512xf32>
    %16 = arith.maximumf %8, %15 : vector<6x512xf32>
    %c2 = arith.constant 2 : index
    %c0_11 = arith.constant 0 : index
    %c0_12 = arith.constant 0 : index
    %17 = vector.load %arg1[%c2, %c0_11, %c0_12] : memref<4x25x512xf32, #tpu.memory_space<vmem>>, vector<1x25x512xf32>
    %18 = vector.shape_cast %17 : vector<1x25x512xf32> to vector<25x512xf32>
    %cst_13 = arith.constant dense<0.000000e+00> : vector<6x512xf32>
    %19 = tpu.matmul %0, %18, %cst_13 {dimension_numbers = #tpu.dot_dimension_numbers<[1], [0], [0], [1], [0, 0, 1, 1], [], []>} : vector<6x25xf32>, vector<25x512xf32>, vector<6x512xf32> -> vector<6x512xf32>
    %20 = vector.broadcast %1 : vector<6x1xf32> to vector<6x512xf32>
    %21 = arith.addf %19, %20 : vector<6x512xf32>
    %cst_14 = arith.constant 0.000000e+00 : f32
    %22 = vector.broadcast %cst_14 : f32 to vector<6x512xf32>
    %23 = arith.maximumf %21, %22 : vector<6x512xf32>
    %24 = arith.maximumf %16, %23 : vector<6x512xf32>
    %c3 = arith.constant 3 : index
    %c0_15 = arith.constant 0 : index
    %c0_16 = arith.constant 0 : index
    %25 = vector.load %arg1[%c3, %c0_15, %c0_16] : memref<4x25x512xf32, #tpu.memory_space<vmem>>, vector<1x25x512xf32>
    %26 = vector.shape_cast %25 : vector<1x25x512xf32> to vector<25x512xf32>
    %cst_17 = arith.constant dense<0.000000e+00> : vector<6x512xf32>
    %27 = tpu.matmul %0, %26, %cst_17 {dimension_numbers = #tpu.dot_dimension_numbers<[1], [0], [0], [1], [0, 0, 1, 1], [], []>} : vector<6x25xf32>, vector<25x512xf32>, vector<6x512xf32> -> vector<6x512xf32>
    %28 = vector.broadcast %1 : vector<6x1xf32> to vector<6x512xf32>
    %29 = arith.addf %27, %28 : vector<6x512xf32>
    %cst_18 = arith.constant 0.000000e+00 : f32
    %30 = vector.broadcast %cst_18 : f32 to vector<6x512xf32>
    %31 = arith.maximumf %29, %30 : vector<6x512xf32>
    %32 = arith.maximumf %24, %31 : vector<6x512xf32>
    %c0_19 = arith.constant 0 : index
    %c0_20 = arith.constant 0 : index
    %33 = vector.load %arg4[%c0_19, %c0_20] : memref<6x512xf32, #tpu.memory_space<vmem>>, vector<6x512xf32>
    tpu.vector_store %arg4[%c0_19, %c0_20], %32 {strides = array<i32>} : memref<6x512xf32, #tpu.memory_space<vmem>>, vector<6x512xf32>,
    return
  }
  func.func @transform_0(%arg0: i32) -> (i32, i32, i32) {
    %c0_i32 = arith.constant 0 : i32
    %c0_i32_0 = arith.constant 0 : i32
    %c0_i32_1 = arith.constant 0 : i32
    return %c0_i32, %c0_i32_0, %arg0 : i32, i32, i32
  }
  func.func @transform_1(%arg0: i32) -> (i32, i32) {
    %c0_i32 = arith.constant 0 : i32
    %c0_i32_0 = arith.constant 0 : i32
    %c0_i32_1 = arith.constant 0 : i32
    return %c0_i32, %c0_i32_0 : i32, i32
  }
  func.func @transform_2(%arg0: i32) -> (i32, i32) {
    %c0_i32 = arith.constant 0 : i32
    %c0_i32_0 = arith.constant 0 : i32
    %c0_i32_1 = arith.constant 0 : i32
    return %c0_i32, %c0_i32_0 : i32, i32
  }
  func.func @transform_3(%arg0: i32) -> (i32, i32) {
    %c0_i32 = arith.constant 0 : i32
    %c0_i32_0 = arith.constant 0 : i32
    return %c0_i32, %arg0 : i32, i32
  }
}

module attributes {stable_mosaic.version = 11 : i64} {
  func.func @_conv_relu_pool_kernel(%arg0: i32, %arg1: memref<4x150x128xf32, #tpu.memory_space<vmem>>, %arg2: memref<12x150xf32, #tpu.memory_space<vmem>>, %arg3: memref<12x1xf32, #tpu.memory_space<vmem>>, %arg4: memref<12x128xf32, #tpu.memory_space<vmem>>) attributes {dimension_semantics = [#tpu.dimension_semantics<parallel>], iteration_bounds = array<i64: 1>, scalar_prefetch = 0 : i64, scratch_operands = 0 : i64, tpu.core_type = #tpu.core_type<tc>, window_params = [{transform_indices = @transform_0, window_bounds = array<i64: 4, 150, 128>}, {pipeline_mode = #tpu.pipeline_mode<synchronous>, transform_indices = @transform_1, window_bounds = array<i64: 12, 150>}, {pipeline_mode = #tpu.pipeline_mode<synchronous>, transform_indices = @transform_2, window_bounds = array<i64: 12, 1>}, {transform_indices = @transform_3, window_bounds = array<i64: 12, 128>}]} {
    %c0 = arith.constant 0 : index
    %c0_0 = arith.constant 0 : index
    %0 = vector.load %arg2[%c0, %c0_0] : memref<12x150xf32, #tpu.memory_space<vmem>>, vector<12x150xf32>
    %c0_1 = arith.constant 0 : index
    %c0_2 = arith.constant 0 : index
    %1 = vector.load %arg3[%c0_1, %c0_2] : memref<12x1xf32, #tpu.memory_space<vmem>>, vector<12x1xf32>
    %c0_3 = arith.constant 0 : index
    %c0_4 = arith.constant 0 : index
    %c0_5 = arith.constant 0 : index
    %2 = vector.load %arg1[%c0_3, %c0_4, %c0_5] : memref<4x150x128xf32, #tpu.memory_space<vmem>>, vector<1x150x128xf32>
    %3 = vector.shape_cast %2 : vector<1x150x128xf32> to vector<150x128xf32>
    %cst = arith.constant dense<0.000000e+00> : vector<12x128xf32>
    %4 = tpu.matmul %0, %3, %cst {dimension_numbers = #tpu.dot_dimension_numbers<[1], [0], [0], [1], [0, 0, 1, 1], [], []>} : vector<12x150xf32>, vector<150x128xf32>, vector<12x128xf32> -> vector<12x128xf32>
    %5 = vector.broadcast %1 : vector<12x1xf32> to vector<12x128xf32>
    %6 = arith.addf %4, %5 : vector<12x128xf32>
    %cst_6 = arith.constant 0.000000e+00 : f32
    %7 = vector.broadcast %cst_6 : f32 to vector<12x128xf32>
    %8 = arith.maximumf %6, %7 : vector<12x128xf32>
    %c1 = arith.constant 1 : index
    %c0_7 = arith.constant 0 : index
    %c0_8 = arith.constant 0 : index
    %9 = vector.load %arg1[%c1, %c0_7, %c0_8] : memref<4x150x128xf32, #tpu.memory_space<vmem>>, vector<1x150x128xf32>
    %10 = vector.shape_cast %9 : vector<1x150x128xf32> to vector<150x128xf32>
    %cst_9 = arith.constant dense<0.000000e+00> : vector<12x128xf32>
    %11 = tpu.matmul %0, %10, %cst_9 {dimension_numbers = #tpu.dot_dimension_numbers<[1], [0], [0], [1], [0, 0, 1, 1], [], []>} : vector<12x150xf32>, vector<150x128xf32>, vector<12x128xf32> -> vector<12x128xf32>
    %12 = vector.broadcast %1 : vector<12x1xf32> to vector<12x128xf32>
    %13 = arith.addf %11, %12 : vector<12x128xf32>
    %cst_10 = arith.constant 0.000000e+00 : f32
    %14 = vector.broadcast %cst_10 : f32 to vector<12x128xf32>
    %15 = arith.maximumf %13, %14 : vector<12x128xf32>
    %16 = arith.maximumf %8, %15 : vector<12x128xf32>
    %c2 = arith.constant 2 : index
    %c0_11 = arith.constant 0 : index
    %c0_12 = arith.constant 0 : index
    %17 = vector.load %arg1[%c2, %c0_11, %c0_12] : memref<4x150x128xf32, #tpu.memory_space<vmem>>, vector<1x150x128xf32>
    %18 = vector.shape_cast %17 : vector<1x150x128xf32> to vector<150x128xf32>
    %cst_13 = arith.constant dense<0.000000e+00> : vector<12x128xf32>
    %19 = tpu.matmul %0, %18, %cst_13 {dimension_numbers = #tpu.dot_dimension_numbers<[1], [0], [0], [1], [0, 0, 1, 1], [], []>} : vector<12x150xf32>, vector<150x128xf32>, vector<12x128xf32> -> vector<12x128xf32>
    %20 = vector.broadcast %1 : vector<12x1xf32> to vector<12x128xf32>
    %21 = arith.addf %19, %20 : vector<12x128xf32>
    %cst_14 = arith.constant 0.000000e+00 : f32
    %22 = vector.broadcast %cst_14 : f32 to vector<12x128xf32>
    %23 = arith.maximumf %21, %22 : vector<12x128xf32>
    %24 = arith.maximumf %16, %23 : vector<12x128xf32>
    %c3 = arith.constant 3 : index
    %c0_15 = arith.constant 0 : index
    %c0_16 = arith.constant 0 : index
    %25 = vector.load %arg1[%c3, %c0_15, %c0_16] : memref<4x150x128xf32, #tpu.memory_space<vmem>>, vector<1x150x128xf32>
    %26 = vector.shape_cast %25 : vector<1x150x128xf32> to vector<150x128xf32>
    %cst_17 = arith.constant dense<0.000000e+00> : vector<12x128xf32>
    %27 = tpu.matmul %0, %26, %cst_17 {dimension_numbers = #tpu.dot_dimension_numbers<[1], [0], [0], [1], [0, 0, 1, 1], [], []>} : vector<12x150xf32>, vector<150x128xf32>, vector<12x128xf32> -> vector<12x128xf32>
    %28 = vector.broadcast %1 : vector<12x1xf32> to vector<12x128xf32>
    %29 = arith.addf %27, %28 : vector<12x128xf32>
    %cst_18 = arith.constant 0.000000e+00 : f32
    %30 = vector.broadcast %cst_18 : f32 to vector<12x128xf32>
    %31 = arith.maximumf %29, %30 : vector<12x128xf32>
    %32 = arith.maximumf %24, %31 : vector<12x128xf32>
    %c0_19 = arith.constant 0 : index
    %c0_20 = arith.constant 0 : index
    %33 = vector.load %arg4[%c0_19, %c0_20] : memref<12x128xf32, #tpu.memory_space<vmem>>, vector<12x128xf32>
    tpu.vector_store %arg4[%c0_19, %c0_20], %32 {strides = array<i32>} : memref<12x128xf32, #tpu.memory_space<vmem>>, vector<12x128xf32>,
    return
  }
  func.func @transform_0(%arg0: i32) -> (i32, i32, i32) {
    %c0_i32 = arith.constant 0 : i32
    %c0_i32_0 = arith.constant 0 : i32
    %c0_i32_1 = arith.constant 0 : i32
    return %c0_i32, %c0_i32_0, %arg0 : i32, i32, i32
  }
  func.func @transform_1(%arg0: i32) -> (i32, i32) {
    %c0_i32 = arith.constant 0 : i32
    %c0_i32_0 = arith.constant 0 : i32
    %c0_i32_1 = arith.constant 0 : i32
    return %c0_i32, %c0_i32_0 : i32, i32
  }
  func.func @transform_2(%arg0: i32) -> (i32, i32) {
    %c0_i32 = arith.constant 0 : i32
    %c0_i32_0 = arith.constant 0 : i32
    %c0_i32_1 = arith.constant 0 : i32
    return %c0_i32, %c0_i32_0 : i32, i32
  }
  func.func @transform_3(%arg0: i32) -> (i32, i32) {
    %c0_i32 = arith.constant 0 : i32
    %c0_i32_0 = arith.constant 0 : i32
    return %c0_i32, %arg0 : i32, i32
  }
}

module attributes {stable_mosaic.version = 11 : i64} {
  func.func @_mlp_softmax_kernel(%arg0: i32, %arg1: memref<192x128xf32, #tpu.memory_space<vmem>>, %arg2: memref<84x192xf32, #tpu.memory_space<vmem>>, %arg3: memref<84x1xf32, #tpu.memory_space<vmem>>, %arg4: memref<42x84xf32, #tpu.memory_space<vmem>>, %arg5: memref<42x1xf32, #tpu.memory_space<vmem>>, %arg6: memref<3x42xf32, #tpu.memory_space<vmem>>, %arg7: memref<3x1xf32, #tpu.memory_space<vmem>>, %arg8: memref<3x128xf32, #tpu.memory_space<vmem>>) attributes {dimension_semantics = [#tpu.dimension_semantics<parallel>], iteration_bounds = array<i64: 1>, scalar_prefetch = 0 : i64, scratch_operands = 0 : i64, tpu.core_type = #tpu.core_type<tc>, window_params = [{transform_indices = @transform_0, window_bounds = array<i64: 192, 128>}, {pipeline_mode = #tpu.pipeline_mode<synchronous>, transform_indices = @transform_1, window_bounds = array<i64: 84, 192>}, {pipeline_mode = #tpu.pipeline_mode<synchronous>, transform_indices = @transform_2, window_bounds = array<i64: 84, 1>}, {pipeline_mode = #tpu.pipeline_mode<synchronous>, transform_indices = @transform_3, window_bounds = array<i64: 42, 84>}, {pipeline_mode = #tpu.pipeline_mode<synchronous>, transform_indices = @transform_4, window_bounds = array<i64: 42, 1>}, {pipeline_mode = #tpu.pipeline_mode<synchronous>, transform_indices = @transform_5, window_bounds = array<i64: 3, 42>}, {pipeline_mode = #tpu.pipeline_mode<synchronous>, transform_indices = @transform_6, window_bounds = array<i64: 3, 1>}, {transform_indices = @transform_7, window_bounds = array<i64: 3, 128>}]} {
    %c0 = arith.constant 0 : index
    %c0_0 = arith.constant 0 : index
    %0 = vector.load %arg2[%c0, %c0_0] : memref<84x192xf32, #tpu.memory_space<vmem>>, vector<84x192xf32>
    %c0_1 = arith.constant 0 : index
    %c0_2 = arith.constant 0 : index
    %1 = vector.load %arg1[%c0_1, %c0_2] : memref<192x128xf32, #tpu.memory_space<vmem>>, vector<192x128xf32>
    %cst = arith.constant dense<0.000000e+00> : vector<84x128xf32>
    %2 = tpu.matmul %0, %1, %cst {dimension_numbers = #tpu.dot_dimension_numbers<[1], [0], [0], [1], [0, 0, 1, 1], [], []>} : vector<84x192xf32>, vector<192x128xf32>, vector<84x128xf32> -> vector<84x128xf32>
    %c0_3 = arith.constant 0 : index
    %c0_4 = arith.constant 0 : index
    %3 = vector.load %arg3[%c0_3, %c0_4] : memref<84x1xf32, #tpu.memory_space<vmem>>, vector<84x1xf32>
    %4 = vector.broadcast %3 : vector<84x1xf32> to vector<84x128xf32>
    %5 = arith.addf %2, %4 : vector<84x128xf32>
    %cst_5 = arith.constant 0.000000e+00 : f32
    %6 = vector.broadcast %cst_5 : f32 to vector<84x128xf32>
    %7 = arith.maximumf %5, %6 : vector<84x128xf32>
    %c0_6 = arith.constant 0 : index
    %c0_7 = arith.constant 0 : index
    %8 = vector.load %arg4[%c0_6, %c0_7] : memref<42x84xf32, #tpu.memory_space<vmem>>, vector<42x84xf32>
    %cst_8 = arith.constant dense<0.000000e+00> : vector<42x128xf32>
    %9 = tpu.matmul %8, %7, %cst_8 {dimension_numbers = #tpu.dot_dimension_numbers<[1], [0], [0], [1], [0, 0, 1, 1], [], []>} : vector<42x84xf32>, vector<84x128xf32>, vector<42x128xf32> -> vector<42x128xf32>
    %c0_9 = arith.constant 0 : index
    %c0_10 = arith.constant 0 : index
    %10 = vector.load %arg5[%c0_9, %c0_10] : memref<42x1xf32, #tpu.memory_space<vmem>>, vector<42x1xf32>
    %11 = vector.broadcast %10 : vector<42x1xf32> to vector<42x128xf32>
    %12 = arith.addf %9, %11 : vector<42x128xf32>
    %cst_11 = arith.constant 0.000000e+00 : f32
    %13 = vector.broadcast %cst_11 : f32 to vector<42x128xf32>
    %14 = arith.maximumf %12, %13 : vector<42x128xf32>
    %c0_12 = arith.constant 0 : index
    %c0_13 = arith.constant 0 : index
    %15 = vector.load %arg6[%c0_12, %c0_13] : memref<3x42xf32, #tpu.memory_space<vmem>>, vector<3x42xf32>
    %cst_14 = arith.constant dense<0.000000e+00> : vector<3x128xf32>
    %16 = tpu.matmul %15, %14, %cst_14 {dimension_numbers = #tpu.dot_dimension_numbers<[1], [0], [0], [1], [0, 0, 1, 1], [], []>} : vector<3x42xf32>, vector<42x128xf32>, vector<3x128xf32> -> vector<3x128xf32>
    %c0_15 = arith.constant 0 : index
    %c0_16 = arith.constant 0 : index
    %17 = vector.load %arg7[%c0_15, %c0_16] : memref<3x1xf32, #tpu.memory_space<vmem>>, vector<3x1xf32>
    %18 = vector.broadcast %17 : vector<3x1xf32> to vector<3x128xf32>
    %19 = arith.addf %16, %18 : vector<3x128xf32>
    %20 = vector.extract_strided_slice %19 {offsets = [0, 0], sizes = [1, 128], strides = [1, 1]} : vector<3x128xf32> to vector<1x128xf32>
    %21 = vector.extract_strided_slice %19 {offsets = [1, 0], sizes = [1, 128], strides = [1, 1]} : vector<3x128xf32> to vector<1x128xf32>
    %22 = vector.extract_strided_slice %19 {offsets = [2, 0], sizes = [1, 128], strides = [1, 1]} : vector<3x128xf32> to vector<1x128xf32>
    %23 = arith.maximumf %20, %21 : vector<1x128xf32>
    %24 = arith.maximumf %23, %22 : vector<1x128xf32>
    %25 = arith.subf %20, %24 : vector<1x128xf32>
    %26 = math.exp %25 : vector<1x128xf32>
    %27 = arith.subf %21, %24 : vector<1x128xf32>
    %28 = math.exp %27 : vector<1x128xf32>
    %29 = arith.subf %22, %24 : vector<1x128xf32>
    %30 = math.exp %29 : vector<1x128xf32>
    %31 = arith.addf %26, %28 : vector<1x128xf32>
    %32 = arith.addf %31, %30 : vector<1x128xf32>
    %cst_17 = arith.constant 1.000000e+00 : f32
    %33 = vector.broadcast %cst_17 : f32 to vector<1x128xf32>
    %34 = arith.divf %33, %32 : vector<1x128xf32>
    %35 = arith.mulf %26, %34 : vector<1x128xf32>
    %c0_18 = arith.constant 0 : index
    %c0_19 = arith.constant 0 : index
    %36 = vector.load %arg8[%c0_18, %c0_19] : memref<3x128xf32, #tpu.memory_space<vmem>>, vector<1x128xf32>
    tpu.vector_store %arg8[%c0_18, %c0_19], %35 {strides = array<i32>} : memref<3x128xf32, #tpu.memory_space<vmem>>, vector<1x128xf32>,
    %37 = arith.mulf %28, %34 : vector<1x128xf32>
    %c1 = arith.constant 1 : index
    %c0_20 = arith.constant 0 : index
    %38 = vector.load %arg8[%c1, %c0_20] : memref<3x128xf32, #tpu.memory_space<vmem>>, vector<1x128xf32>
    tpu.vector_store %arg8[%c1, %c0_20], %37 {strides = array<i32>} : memref<3x128xf32, #tpu.memory_space<vmem>>, vector<1x128xf32>,
    %39 = arith.mulf %30, %34 : vector<1x128xf32>
    %c2 = arith.constant 2 : index
    %c0_21 = arith.constant 0 : index
    %40 = vector.load %arg8[%c2, %c0_21] : memref<3x128xf32, #tpu.memory_space<vmem>>, vector<1x128xf32>
    tpu.vector_store %arg8[%c2, %c0_21], %39 {strides = array<i32>} : memref<3x128xf32, #tpu.memory_space<vmem>>, vector<1x128xf32>,
    return
  }
  func.func @transform_0(%arg0: i32) -> (i32, i32) {
    %c0_i32 = arith.constant 0 : i32
    %c0_i32_0 = arith.constant 0 : i32
    return %c0_i32, %arg0 : i32, i32
  }
  func.func @transform_1(%arg0: i32) -> (i32, i32) {
    %c0_i32 = arith.constant 0 : i32
    %c0_i32_0 = arith.constant 0 : i32
    %c0_i32_1 = arith.constant 0 : i32
    return %c0_i32, %c0_i32_0 : i32, i32
  }
  func.func @transform_2(%arg0: i32) -> (i32, i32) {
    %c0_i32 = arith.constant 0 : i32
    %c0_i32_0 = arith.constant 0 : i32
    %c0_i32_1 = arith.constant 0 : i32
    return %c0_i32, %c0_i32_0 : i32, i32
  }
  func.func @transform_3(%arg0: i32) -> (i32, i32) {
    %c0_i32 = arith.constant 0 : i32
    %c0_i32_0 = arith.constant 0 : i32
    %c0_i32_1 = arith.constant 0 : i32
    return %c0_i32, %c0_i32_0 : i32, i32
  }
  func.func @transform_4(%arg0: i32) -> (i32, i32) {
    %c0_i32 = arith.constant 0 : i32
    %c0_i32_0 = arith.constant 0 : i32
    %c0_i32_1 = arith.constant 0 : i32
    return %c0_i32, %c0_i32_0 : i32, i32
  }
  func.func @transform_5(%arg0: i32) -> (i32, i32) {
    %c0_i32 = arith.constant 0 : i32
    %c0_i32_0 = arith.constant 0 : i32
    %c0_i32_1 = arith.constant 0 : i32
    return %c0_i32, %c0_i32_0 : i32, i32
  }
  func.func @transform_6(%arg0: i32) -> (i32, i32) {
    %c0_i32 = arith.constant 0 : i32
    %c0_i32_0 = arith.constant 0 : i32
    %c0_i32_1 = arith.constant 0 : i32
    return %c0_i32, %c0_i32_0 : i32, i32
  }
  func.func @transform_7(%arg0: i32) -> (i32, i32) {
    %c0_i32 = arith.constant 0 : i32
    %c0_i32_0 = arith.constant 0 : i32
    return %c0_i32, %arg0 : i32, i32
  }
}

</mosaic_0001>

<llo_original>
// kernel: gate_cnn_fashion_softmax.3
$region0: #{gate_cnn_fashion_softmax.3}
  #allocation0 [shape = 'u32[]', space=smem, size = 0x4, offset = 0x4, fixed_abs, tag = 'smem constant byte address 0x4 - core index']
  #allocation1 [shape = 'u32[144,128]{1,0:T(1,128)}', space=vmem, size = 0x12000, scoped, tag = 'internal scratch']
  %s0 = inlined_call_operand.vmem [shape: f32[4,25,1536], index: 0, kind: input, shape index: {}]
  %s1 = inlined_call_operand.vmem [shape: f32[6,25], index: 1, kind: input, shape index: {}]
  %s2 = inlined_call_operand.vmem [shape: f32[6,1], index: 2, kind: input, shape index: {}]
  %s3 = inlined_call_operand.vmem [shape: f32[6,1536], index: 3, kind: output, shape index: {}]
  %s4 = sld [smem:[#allocation0]]
  $region68: #{gate_cnn_fashion_softmax.3} parent=0
    _
  %s6 = ssub.s32 1, %s4
  %s7 = scalar_select 0, %s6, %s4
  $region1: #{gate_cnn_fashion_softmax.3} parent=0
    #allocation2 [shape = 'u8[524288]{0}', space=vmem, size = 0x80000, scoped, tag = 'input window, operand 0']
    loop: start=0, step=1, limit=5
    $region2: #{gate_cnn_fashion_softmax.3} parent=1 // loop_pre_header
      _
    $region3: #{gate_cnn_fashion_softmax.3} parent=1 // loop_header
      %s9 = sphi 0, %s13
      %p10 = scmp.ge.s32.totalorder %s9, 5
      %s19 = sphi 0, %s21
      %s22 = sphi 0, %s19
      %s23 = sphi 0, %s22
      %s39 = sphi 0, %s23
      %s43 = sphi 0, %s43
      %s45 = sphi 0, %s43
      %s46 = sphi 0, %s45
      %s60 = sphi 0, %s46
      %s64 = sphi 0, %s64
      %s66 = sphi 0, %s64
      %s67 = sphi 0, %s66
      %s81 = sphi 0, %s67
      %s87 = sphi 0, %s89
      %s90 = sphi 0, %s87
      %s91 = sphi 0, %s90
      %s107 = sphi 0, %s91
    $region4: #{gate_cnn_fashion_softmax.3} parent=1 // loop_header_branch
      %12 = sbr.rel (%p10) target = $region8
    $region5: #{gate_cnn_fashion_softmax.3} parent=1 // loop_body
      %s14 = ssub.s32 %s9, 1
      %s15 = ssub.s32 %s9, 2
      %s16 = sadd.s32 %s9, 1
      %s17 = ssub.s32 %s9, %s16
      %p18 = scmp.eq.s32.totalorder %s17, 0
      %s20 = sadd.s32 %s19, 1
      %s21 = scalar_select %p18, %s19, %s20
      %p24 = pneg %p18
      %p25 = scmp.eq.s32.totalorder %s9, 2
      %p26 = por %p24, %p25
      %p27 = scmp.ne.s32.totalorder %s19, %s22
      %p28 = scmp.eq.s32.totalorder %s9, 0
      %p29 = por %p27, %p28
      %p30 = scmp.ne.s32.totalorder %s19, %s22
      %p31 = scmp.eq.s32.totalorder %s14, 2
      %p32 = por %p30, %p31
      %p33 = scmp.ne.s32.totalorder %s22, %s23
      %p34 = scmp.eq.s32.totalorder %s14, 0
      %p35 = por %p33, %p34
      %p36 = scmp.ne.s32.totalorder %s22, %s23
      %p37 = scmp.eq.s32.totalorder %s15, 2
      %p38 = por %p36, %p37
      %p40 = scmp.ne.s32.totalorder %s23, %s39
      %p41 = scmp.eq.s32.totalorder %s15, 0
      %p42 = por %p40, %p41
      %s44 = sadd.s32 %s43, 1
      %p47 = scmp.eq.s32.totalorder %s9, 2
      %p48 = scmp.ne.s32.totalorder %s43, %s45
      %p49 = scmp.eq.s32.totalorder %s9, 0
      %p50 = por %p48, %p49
      %p51 = scmp.ne.s32.totalorder %s43, %s45
      %p52 = scmp.eq.s32.totalorder %s14, 2
      %p53 = por %p51, %p52
      %p54 = scmp.ne.s32.totalorder %s45, %s46
      %p55 = scmp.eq.s32.totalorder %s14, 0
      %p56 = por %p54, %p55
      %p57 = scmp.ne.s32.totalorder %s45, %s46
      %p58 = scmp.eq.s32.totalorder %s15, 2
      %p59 = por %p57, %p58
      %p61 = scmp.ne.s32.totalorder %s46, %s60
      %p62 = scmp.eq.s32.totalorder %s15, 0
      %p63 = por %p61, %p62
      %s65 = sadd.s32 %s64, 1
      %p68 = scmp.eq.s32.totalorder %s9, 2
      %p69 = scmp.ne.s32.totalorder %s64, %s66
      %p70 = scmp.eq.s32.totalorder %s9, 0
      %p71 = por %p69, %p70
      %p72 = scmp.ne.s32.totalorder %s64, %s66
      %p73 = scmp.eq.s32.totalorder %s14, 2
      %p74 = por %p72, %p73
      %p75 = scmp.ne.s32.totalorder %s66, %s67
      %p76 = scmp.eq.s32.totalorder %s14, 0
      %p77 = por %p75, %p76
      %p78 = scmp.ne.s32.totalorder %s66, %s67
      %p79 = scmp.eq.s32.totalorder %s15, 2
      %p80 = por %p78, %p79
      %p82 = scmp.ne.s32.totalorder %s67, %s81
      %p83 = scmp.eq.s32.totalorder %s15, 0
      %p84 = por %p82, %p83
      %s85 = ssub.s32 %s9, %s16
      %p86 = scmp.eq.s32.totalorder %s85, 0
      %s88 = sadd.s32 %s87, 1
      %s89 = scalar_select %p86, %s87, %s88
      %p92 = pneg %p86
      %p93 = scmp.eq.s32.totalorder %s9, 2
      %p94 = por %p92, %p93
      %p95 = scmp.ne.s32.totalorder %s87, %s90
      %p96 = scmp.eq.s32.totalorder %s9, 0
      %p97 = por %p95, %p96
      %p98 = scmp.ne.s32.totalorder %s87, %s90
      %p99 = scmp.eq.s32.totalorder %s14, 2
      %p100 = por %p98, %p99
      %p101 = scmp.ne.s32.totalorder %s90, %s91
      %p102 = scmp.eq.s32.totalorder %s14, 0
      %p103 = por %p101, %p102
      %p104 = scmp.ne.s32.totalorder %s90, %s91
      %p105 = scmp.eq.s32.totalorder %s15, 2
      %p106 = por %p104, %p105
      %p108 = scmp.ne.s32.totalorder %s91, %s107
      %p109 = scmp.eq.s32.totalorder %s15, 0
      %p110 = por %p108, %p109
      %p111 = scmp.le.s32.totalorder 1, %s9
      %p112 = scmp.lt.s32.totalorder %s9, 4
      %p113 = pnand %p111, %p112
      %p114 = pneg %p113
      // Predicated region
      $region9: #{gate_cnn_fashion_softmax.3} parent=5 // pred_check
        _
      $region10: #{gate_cnn_fashion_softmax.3} parent=5 // pred_check_branch
        %116 = sbr.rel (%p113) target = $region12
      $region11: #{gate_cnn_fashion_softmax.3} parent=5 // pred_region
        %s117 = ssub.s32 %s9, 1
        // Predicated region
        $region13: #{gate_cnn_fashion_softmax.3} parent=11 // pred_check
          %p118 = pneg %p56
        $region14: #{gate_cnn_fashion_softmax.3} parent=11 // pred_check_branch
          %120 = sbr.rel (%p118) target = $region16
        $region15: #{gate_cnn_fashion_softmax.3} parent=11 // pred_region
          _
        $region16: #{gate_cnn_fashion_softmax.3} parent=11 // pred_fallthru
          _
        // Predicated region
        $region17: #{gate_cnn_fashion_softmax.3} parent=11 // pred_check
          %p121 = pneg %p77
        $region18: #{gate_cnn_fashion_softmax.3} parent=11 // pred_check_branch
          %123 = sbr.rel (%p121) target = $region20
        $region19: #{gate_cnn_fashion_softmax.3} parent=11 // pred_region
          _
        $region20: #{gate_cnn_fashion_softmax.3} parent=11 // pred_fallthru
          _
      $region12: #{gate_cnn_fashion_softmax.3} parent=5 // pred_fallthru
        _
      %p124 = scmp.lt.s32.totalorder %s9, 3
      // Predicated region
      $region21: #{gate_cnn_fashion_softmax.3} parent=5 // pred_check
        %p125 = pneg %p124
      $region22: #{gate_cnn_fashion_softmax.3} parent=5 // pred_check_branch
        %127 = sbr.rel (%p125) target = $region24
      $region23: #{gate_cnn_fashion_softmax.3} parent=5 // pred_region
        // Predicated region
        $region25: #{gate_cnn_fashion_softmax.3} parent=23 // pred_check
          %p128 = pneg %p29
        $region26: #{gate_cnn_fashion_softmax.3} parent=23 // pred_check_branch
          %130 = sbr.rel (%p128) target = $region28
        $region27: #{gate_cnn_fashion_softmax.3} parent=23 // pred_region
          %s131 = sand.u32 %s19, 1
          %s132 = sand.u32 %s19, 1
          %s133 = smul.addr %s132, 512
          %s134 = scalar_lea.vmem [#allocation2], %s133
          %s135 = smul.u32 4, %s9
          %s136 = smul.addr %s135, 8
          %s137 = scalar_lea.vmem %s0, %s136
          // Predicated region
          $region29: #{gate_cnn_fashion_softmax.3} parent=27 // pred_check
            _
          $region30: #{gate_cnn_fashion_softmax.3} parent=27 // pred_check_branch
            %139 = sbr.rel (0) target = $region32
          $region31: #{gate_cnn_fashion_softmax.3} parent=27 // pred_region
            // Predicated region
            $region33: #{gate_cnn_fashion_softmax.3} parent=31 // pred_check
              _
            $region34: #{gate_cnn_fashion_softmax.3} parent=31 // pred_check_branch
              %141 = sbr.rel (0) target = $region36
            $region35: #{gate_cnn_fashion_softmax.3} parent=31 // pred_region
              loop: start=0, step=1, limit=1
              $region37: #{gate_cnn_fashion_softmax.3} parent=35 // loop_pre_header
                _
              $region38: #{gate_cnn_fashion_softmax.3} parent=35 // loop_header
                %s143 = sphi 0, %s147
                %p144 = scmp.ge.s32.totalorder %s143, 1
                %s148 = sphi %s137, %s137
                %s149 = sphi %s134, %s134
              $region39: #{gate_cnn_fashion_softmax.3} parent=35 // loop_header_branch
                %146 = sbr.rel (%p144) target = $region43
              $region40: #{gate_cnn_fashion_softmax.3} parent=35 // loop_body
                %v150 = vld [vmem:[%s148] sm:$0xff]
                %151 = vst [vmem:[%s149] sm:$0xff] %v150
                %v152 = vld [vmem:[%s148 + $0x8] sm:$0xff]
                %153 = vst [vmem:[%s149 + $0x8] sm:$0xff] %v152
                %v154 = vld [vmem:[%s148 + $0x10] sm:$0xff]
                %155 = vst [vmem:[%s149 + $0x10] sm:$0xff] %v154
                %v156 = vld [vmem:[%s148 + $0x18] sm:$0xff]
                %157 = vst [vmem:[%s149 + $0x18] sm:$0xff] %v156
                %v158 = vld [vmem:[%s148 + $0x60] sm:$0xff]
                %159 = vst [vmem:[%s149 + $0x20] sm:$0xff] %v158
                %v160 = vld [vmem:[%s148 + $0x68] sm:$0xff]
                %161 = vst [vmem:[%s149 + $0x28] sm:$0xff] %v160
                %v162 = vld [vmem:[%s148 + $0x70] sm:$0xff]
                %163 = vst [vmem:[%s149 + $0x30] sm:$0xff] %v162
                %v164 = vld [vmem:[%s148 + $0x78] sm:$0xff]
                %165 = vst [vmem:[%s149 + $0x38] sm:$0xff] %v164
                %v166 = vld [vmem:[%s148 + $0xc0] sm:$0xff]
                %167 = vst [vmem:[%s149 + $0x40] sm:$0xff] %v166
                %v168 = vld [vmem:[%s148 + $0xc8] sm:$0xff]
                %169 = vst [vmem:[%s149 + $0x48] sm:$0xff] %v168
                %v170 = vld [vmem:[%s148 + $0xd0] sm:$0xff]
                %171 = vst [vmem:[%s149 + $0x50] sm:$0xff] %v170
                %v172 = vld [vmem:[%s148 + $0xd8] sm:$0xff]
                %173 = vst [vmem:[%s149 + $0x58] sm:$0xff] %v172
                %v174 = vld [vmem:[%s148 + $0x120] sm:$0xff]
                %175 = vst [vmem:[%s149 + $0x60] sm:$0xff] %v174
                %v176 = vld [vmem:[%s148 + $0x128] sm:$0xff]
                %177 = vst [vmem:[%s149 + $0x68] sm:$0xff] %v176
                %v178 = vld [vmem:[%s148 + $0x130] sm:$0xff]
                %179 = vst [vmem:[%s149 + $0x70] sm:$0xff] %v178
                %v180 = vld [vmem:[%s148 + $0x138] sm:$0xff]
                %181 = vst [vmem:[%s149 + $0x78] sm:$0xff] %v180
                %v182 = vld [vmem:[%s148 + $0x180] sm:$0xff]
                %183 = vst [vmem:[%s149 + $0x80] sm:$0xff] %v182
                %v184 = vld [vmem:[%s148 + $0x188] sm:$0xff]
                %185 = vst [vmem:[%s149 + $0x88] sm:$0xff] %v184
                %v186 = vld [vmem:[%s148 + $0x190] sm:$0xff]
                %187 = vst [vmem:[%s149 + $0x90] sm:$0xff] %v186
                %v188 = vld [vmem:[%s148 + $0x198] sm:$0xff]
                %189 = vst [vmem:[%s149 + $0x98] sm:$0xff] %v188
                %v190 = vld [vmem:[%s148 + $0x1e0] sm:$0xff]
                %191 = vst [vmem:[%s149 + $0xa0] sm:$0xff] %v190
                %v192 = vld [vmem:[%s148 + $0x1e8] sm:$0xff]
                %193 = vst [vmem:[%s149 + $0xa8] sm:$0xff] %v192
                %v194 = vld [vmem:[%s148 + $0x1f0] sm:$0xff]
                %195 = vst [vmem:[%s149 + $0xb0] sm:$0xff] %v194
                %v196 = vld [vmem:[%s148 + $0x1f8] sm:$0xff]
                %197 = vst [vmem:[%s149 + $0xb8] sm:$0xff] %v196
                %v198 = vld [vmem:[%s148 + $0x240] sm:$0xff]
                %199 = vst [vmem:[%s149 + $0xc0] sm:$0xff] %v198
                %v200 = vld [vmem:[%s148 + $0x248] sm:$0xff]
                %201 = vst [vmem:[%s149 + $0xc8] sm:$0xff] %v200
                %v202 = vld [vmem:[%s148 + $0x250] sm:$0xff]
                %203 = vst [vmem:[%s149 + $0xd0] sm:$0xff] %v202
                %v204 = vld [vmem:[%s148 + $0x258] sm:$0xff]
                %205 = vst [vmem:[%s149 + $0xd8] sm:$0xff] %v204
                %v206 = vld [vmem:[%s148 + $0x2a0] sm:$0xff]
                %207 = vst [vmem:[%s149 + $0xe0] sm:$0xff] %v206
                %v208 = vld [vmem:[%s148 + $0x2a8] sm:$0xff]
                %209 = vst [vmem:[%s149 + $0xe8] sm:$0xff] %v208
                %v210 = vld [vmem:[%s148 + $0x2b0] sm:$0xff]
                %211 = vst [vmem:[%s149 + $0xf0] sm:$0xff] %v210
                %v212 = vld [vmem:[%s148 + $0x2b8] sm:$0xff]
                %213 = vst [vmem:[%s149 + $0xf8] sm:$0xff] %v212
                %v214 = vld [vmem:[%s148 + $0x300] sm:$0xff]
                %215 = vst [vmem:[%s149 + $0x100] sm:$0xff] %v214
                %v216 = vld [vmem:[%s148 + $0x308] sm:$0xff]
                %217 = vst [vmem:[%s149 + $0x108] sm:$0xff] %v216
                %v218 = vld [vmem:[%s148 + $0x310] sm:$0xff]
                %219 = vst [vmem:[%s149 + $0x110] sm:$0xff] %v218
                %v220 = vld [vmem:[%s148 + $0x318] sm:$0xff]
                %221 = vst [vmem:[%s149 + $0x118] sm:$0xff] %v220
                %v222 = vld [vmem:[%s148 + $0x360] sm:$0xff]
                %223 = vst [vmem:[%s149 + $0x120] sm:$0xff] %v222
                %v224 = vld [vmem:[%s148 + $0x368] sm:$0xff]
                %225 = vst [vmem:[%s149 + $0x128] sm:$0xff] %v224
                %v226 = vld [vmem:[%s148 + $0x370] sm:$0xff]
                %227 = vst [vmem:[%s149 + $0x130] sm:$0xff] %v226
                %v228 = vld [vmem:[%s148 + $0x378] sm:$0xff]
                %229 = vst [vmem:[%s149 + $0x138] sm:$0xff] %v228
                %v230 = vld [vmem:[%s148 + $0x3c0] sm:$0xff]
                %231 = vst [vmem:[%s149 + $0x140] sm:$0xff] %v230
                %v232 = vld [vmem:[%s148 + $0x3c8] sm:$0xff]
                %233 = vst [vmem:[%s149 + $0x148] sm:$0xff] %v232
                %v234 = vld [vmem:[%s148 + $0x3d0] sm:$0xff]
                %235 = vst [vmem:[%s149 + $0x150] sm:$0xff] %v234
                %v236 = vld [vmem:[%s148 + $0x3d8] sm:$0xff]
                %237 = vst [vmem:[%s149 + $0x158] sm:$0xff] %v236
                %v238 = vld [vmem:[%s148 + $0x420] sm:$0xff]
                %239 = vst [vmem:[%s149 + $0x160] sm:$0xff] %v238
                %v240 = vld [vmem:[%s148 + $0x428] sm:$0xff]
                %241 = vst [vmem:[%s149 + $0x168] sm:$0xff] %v240
                %v242 = vld [vmem:[%s148 + $0x430] sm:$0xff]
                %243 = vst [vmem:[%s149 + $0x170] sm:$0xff] %v242
                %v244 = vld [vmem:[%s148 + $0x438] sm:$0xff]
                %245 = vst [vmem:[%s149 + $0x178] sm:$0xff] %v244
                %v246 = vld [vmem:[%s148 + $0x480] sm:$0xff]
                %247 = vst [vmem:[%s149 + $0x180] sm:$0xff] %v246
                %v248 = vld [vmem:[%s148 + $0x488] sm:$0xff]
                %249 = vst [vmem:[%s149 + $0x188] sm:$0xff] %v248
                %v250 = vld [vmem:[%s148 + $0x490] sm:$0xff]
                %251 = vst [vmem:[%s149 + $0x190] sm:$0xff] %v250
                %v252 = vld [vmem:[%s148 + $0x498] sm:$0xff]
                %253 = vst [vmem:[%s149 + $0x198] sm:$0xff] %v252
                %v254 = vld [vmem:[%s148 + $0x4e0] sm:$0xff]
                %255 = vst [vmem:[%s149 + $0x1a0] sm:$0xff] %v254
                %v256 = vld [vmem:[%s148 + $0x4e8] sm:$0xff]
                %257 = vst [vmem:[%s149 + $0x1a8] sm:$0xff] %v256
                %v258 = vld [vmem:[%s148 + $0x4f0] sm:$0xff]
                %259 = vst [vmem:[%s149 + $0x1b0] sm:$0xff] %v258
                %v260 = vld [vmem:[%s148 + $0x4f8] sm:$0xff]
                %261 = vst [vmem:[%s149 + $0x1b8] sm:$0xff] %v260
                %v262 = vld [vmem:[%s148 + $0x540] sm:$0xff]
                %263 = vst [vmem:[%s149 + $0x1c0] sm:$0xff] %v262
                %v264 = vld [vmem:[%s148 + $0x548] sm:$0xff]
                %265 = vst [vmem:[%s149 + $0x1c8] sm:$0xff] %v264
                %v266 = vld [vmem:[%s148 + $0x550] sm:$0xff]
                %267 = vst [vmem:[%s149 + $0x1d0] sm:$0xff] %v266
                %v268 = vld [vmem:[%s148 + $0x558] sm:$0xff]
                %269 = vst [vmem:[%s149 + $0x1d8] sm:$0xff] %v268
                %v270 = vld [vmem:[%s148 + $0x5a0] sm:$0xff]
                %271 = vst [vmem:[%s149 + $0x1e0] sm:$0xff] %v270
                %v272 = vld [vmem:[%s148 + $0x5a8] sm:$0xff]
                %273 = vst [vmem:[%s149 + $0x1e8] sm:$0xff] %v272
                %v274 = vld [vmem:[%s148 + $0x5b0] sm:$0xff]
                %275 = vst [vmem:[%s149 + $0x1f0] sm:$0xff] %v274
                %v276 = vld [vmem:[%s148 + $0x5b8] sm:$0xff]
                %277 = vst [vmem:[%s149 + $0x1f8] sm:$0xff] %v276
              $region41: #{gate_cnn_fashion_softmax.3} parent=35 // loop_footer
                %s147 = sadd.s32 1, %s143
              $region42: #{gate_cnn_fashion_softmax.3} parent=35 // loop_footer_branch
                %142 = sbr.rel target = $region38
              $region43: #{gate_cnn_fashion_softmax.3} parent=35 // loop_exit
                _
            $region36: #{gate_cnn_fashion_softmax.3} parent=31 // pred_fallthru
              _
            // Predicated region
            $region44: #{gate_cnn_fashion_softmax.3} parent=31 // pred_check
              _
            $region45: #{gate_cnn_fashion_softmax.3} parent=31 // pred_check_branch
              %279 = sbr.rel target = $region47
            $region46: #{gate_cnn_fashion_softmax.3} parent=31 // pred_region
              _
            $region47: #{gate_cnn_fashion_softmax.3} parent=31 // pred_fallthru
              _
          $region32: #{gate_cnn_fashion_softmax.3} parent=27 // pred_fallthru
            _
          %280 = vnop
        $region28: #{gate_cnn_fashion_softmax.3} parent=23 // pred_fallthru
          _
      $region24: #{gate_cnn_fashion_softmax.3} parent=5 // pred_fallthru
        _
      %p281 = scmp.le.s32.totalorder 1, %s9
      %p282 = scmp.lt.s32.totalorder %s9, 4
      %p283 = pnand %p281, %p282
      %p284 = pneg %p283
      // Predicated region
      $region48: #{gate_cnn_fashion_softmax.3} parent=5 // pred_check
        _
      $region49: #{gate_cnn_fashion_softmax.3} parent=5 // pred_check_branch
        %286 = sbr.rel (%p283) target = $region51
      $region50: #{gate_cnn_fashion_softmax.3} parent=5 // pred_region
        %s287 = ssub.s32 %s9, 1
        %s288 = sand.u32 %s22, 1
        %s289 = sand.u32 %s22, 1
        %s290 = smul.addr %s289, 512
        %s291 = scalar_lea.vmem [#allocation2], %s290
        // Predicated region
        $region52: #{gate_cnn_fashion_softmax.3} parent=50 // pred_check
          %p292 = pneg %p35
        $region53: #{gate_cnn_fashion_softmax.3} parent=50 // pred_check_branch
          %294 = sbr.rel (%p292) target = $region55
        $region54: #{gate_cnn_fashion_softmax.3} parent=50 // pred_region
          _
        $region55: #{gate_cnn_fashion_softmax.3} parent=50 // pred_fallthru
          _
        %s295 = sand.u32 %s22, 1
        %s296 = sand.u32 %s22, 1
        %s297 = smul.addr %s296, 512
        %s298 = scalar_lea.vmem [#allocation2], %s297
        %p299 = pneg %p35
        %p300 = pneg %p32
        %p301 = pneg %p56
        %p302 = pneg %p53
        %p303 = pneg %p77
        %p304 = pneg %p74
        %p305 = pneg %p103
        %p306 = pneg %p100
        %s307 = smul.u32 4, %s14
        %p308 = scmp.lt.s32.totalorder %s307, 11
        %s309 = scalar_select %p308, %s307, 11
        %s310 = smul.addr %s309, 8
        %s311 = scalar_lea.vmem %s3, %s310
        %s312 = smul.u32 4, %s14
        %s313 = smul.u32 4, %s14
        %p314 = scmp.lt.s32.totalorder %s313, 11
        %s315 = scalar_select %p314, %s313, 11
        %s316 = smul.addr %s315, 8
        %s317 = scalar_lea.vmem %s3, %s316
        %s318 = smul.u32 4, %s14
        %v319 = vld [vmem:[%s1] sm:$0x3f]
        %v320 = vld [vmem:[%s2] sm:$0x3f]
        %v321 = vld [vmem:[%s291] sm:$0xff]
        %v322 = vld [vmem:[%s291 + $0x8] sm:$0xff]
        %v323 = vld [vmem:[%s291 + $0x10] sm:$0xff]
        %v324 = vld [vmem:[%s291 + $0x18] sm:$0xff]
        %v325 = vld [vmem:[%s291 + $0x20] sm:$0xff]
        %v326 = vld [vmem:[%s291 + $0x28] sm:$0xff]
        %v327 = vld [vmem:[%s291 + $0x30] sm:$0xff]
        %v328 = vld [vmem:[%s291 + $0x38] sm:$0xff]
        %v329 = vld [vmem:[%s291 + $0x40] sm:$0xff]
        %v330 = vld [vmem:[%s291 + $0x48] sm:$0xff]
        %v331 = vld [vmem:[%s291 + $0x50] sm:$0xff]
        %v332 = vld [vmem:[%s291 + $0x58] sm:$0xff]
        %v333 = vld [vmem:[%s291 + $0x60] sm:$0x1]
        %v334 = vld [vmem:[%s291 + $0x68] sm:$0x1]
        %v335 = vld [vmem:[%s291 + $0x70] sm:$0x1]
        %v336 = vld [vmem:[%s291 + $0x78] sm:$0x1]
        %338 = vset.pattern.permute.xlu0 0
        %339 = vperm.xlu0 %338, %v320
        %v340 = vpop.permute.xlu0 %339
        %vm342 = vcmask 203776
        %v344 = vsel %vm342, %v319, 0
        %vm346 = vcmask 1040384
        %v348 = vsel %vm346, %v333, 0
        %v351 = vsel %vm346, %v334, 0
        %v354 = vsel %vm346, %v335, 0
        %v357 = vsel %vm346, %v336, 0
        %359 = vmatprep.subr.mxu0 %v322
        %360 = vmatpush1.msra.mxu0 %v321
        %361 = vmatprep.subr.mxu0 %v326
        %362 = vmatpush1.msra.mxu0 %v325
        %363 = vmatprep.subr.mxu0 %v330
        %364 = vmatpush1.msra.mxu0 %v329
        %365 = vmatprep.subr.mxu0 %v351
        %366 = vmatpush1.msra.mxu0 %v348
        %367 = vmatprep.subr.mxu0 0.0
        %368 = vmatpush1.msra.mxu0 0.0
        %369 = vmatprep.subr.mxu0 0.0
        %370 = vmatpush1.msra.mxu0 0.0
        %371 = vmatprep.subr.mxu0 0.0
        %372 = vmatpush1.msra.mxu0 0.0
        %373 = vmatprep.subr.mxu0 0.0
        %374 = vmatpush1.msra.mxu0 0.0
        %375 = vmatprep.subr.mxu0 0.0
        %376 = vmatpush1.msra.mxu0 0.0
        %377 = vmatprep.subr.mxu0 0.0
        %378 = vmatpush1.msra.mxu0 0.0
        %379 = vmatprep.subr.mxu0 0.0
        %380 = vmatpush1.msra.mxu0 0.0
        %381 = vmatprep.subr.mxu0 0.0
        %382 = vmatpush1.msra.mxu0 0.0
        %383 = vmatprep.subr.mxu0 0.0
        %384 = vmatpush1.msra.mxu0 0.0
        %385 = vmatprep.subr.mxu0 0.0
        %386 = vmatpush1.msra.mxu0 0.0
        %387 = vmatprep.subr.mxu0 0.0
        %388 = vmatpush1.msra.mxu0 0.0
        %389 = vmatprep.subr.mxu0 0.0
        %390 = vmatpush1.msra.mxu0 0.0
        %391 = vmatprep.subr.mxu0 0.0
        %392 = vmatpush1.msra.mxu0 0.0
        %393 = vmatprep.subr.mxu0 0.0
        %394 = vmatpush1.msra.mxu0 0.0
        %395 = vmatprep.subr.mxu0 0.0
        %396 = vmatpush1.msra.mxu0 0.0
        %397 = vmatprep.subr.mxu0 0.0
        %398 = vmatpush1.msra.mxu0 0.0
        %399 = vmatprep.subr.mxu0 0.0
        %400 = vmatpush1.msra.mxu0 0.0
        %401 = vmatprep.subr.mxu0 0.0
        %402 = vmatpush1.msra.mxu0 0.0
        %403 = vmatprep.subr.mxu0 0.0
        %404 = vmatpush1.msra.mxu0 0.0
        %405 = vmatprep.subr.mxu0 0.0
        %406 = vmatpush1.msra.mxu0 0.0
        %407 = vmatprep.subr.mxu0 0.0
        %408 = vmatpush1.msra.mxu0 0.0
        %409 = vmatprep.subr.mxu0 0.0
        %410 = vmatpush1.msra.mxu0 0.0
        %411 = vmatprep.subr.mxu0 0.0
        %412 = vmatpush1.msra.mxu0 0.0
        %413 = vmatprep.subr.mxu0 0.0
        %414 = vmatpush1.msra.mxu0 0.0
        %415 = vmatprep.subr.mxu0 0.0
        %416 = vmatpush1.msra.mxu0 0.0
        %417 = vmatprep.subr.mxu0 0.0
        %418 = vmatpush1.msra.mxu0 0.0
        %419 = vmatprep.subr.mxu0 0.0
        %420 = vmatpush1.msra.mxu0 0.0
        %421 = vmatprep.subr.mxu0 0.0
        %422 = vmatpush1.msra.mxu0 0.0
        %423 = vmatprep.mubr.f32.mxu0 0.0
        %424 = vmatmul.mubr.f32.gmra.mrb[0].mxu0 %v344
        %v425 = vpop.f32.mrb[0].mxu0
        %v426 = vadd.f32 %v340, %v425
        %v427 = vpop.f32.mrb[0].mxu0
        %v428 = vadd.f32 %v340, %v427
        %429 = vdwg.mxu0
        %430 = vmatprep.subr.mxu0 %v324
        %431 = vmatpush1.msra.mxu0 %v323
        %432 = vmatprep.subr.mxu0 %v328
        %433 = vmatpush1.msra.mxu0 %v327
        %434 = vmatprep.subr.mxu0 %v332
        %435 = vmatpush1.msra.mxu0 %v331
        %436 = vmatprep.subr.mxu0 %v357
        %437 = vmatpush1.msra.mxu0 %v354
        %438 = vmatprep.subr.mxu0 0.0
        %439 = vmatpush1.msra.mxu0 0.0
        %440 = vmatprep.subr.mxu0 0.0
        %441 = vmatpush1.msra.mxu0 0.0
        %442 = vmatprep.subr.mxu0 0.0
        %443 = vmatpush1.msra.mxu0 0.0
        %444 = vmatprep.subr.mxu0 0.0
        %445 = vmatpush1.msra.mxu0 0.0
        %446 = vmatprep.subr.mxu0 0.0
        %447 = vmatpush1.msra.mxu0 0.0
        %448 = vmatprep.subr.mxu0 0.0
        %449 = vmatpush1.msra.mxu0 0.0
        %450 = vmatprep.subr.mxu0 0.0
        %451 = vmatpush1.msra.mxu0 0.0
        %452 = vmatprep.subr.mxu0 0.0
        %453 = vmatpush1.msra.mxu0 0.0
        %454 = vmatprep.subr.mxu0 0.0
        %455 = vmatpush1.msra.mxu0 0.0
        %456 = vmatprep.subr.mxu0 0.0
        %457 = vmatpush1.msra.mxu0 0.0
        %458 = vmatprep.subr.mxu0 0.0
        %459 = vmatpush1.msra.mxu0 0.0
        %460 = vmatprep.subr.mxu0 0.0
        %461 = vmatpush1.msra.mxu0 0.0
        %462 = vmatprep.subr.mxu0 0.0
        %463 = vmatpush1.msra.mxu0 0.0
        %464 = vmatprep.subr.mxu0 0.0
        %465 = vmatpush1.msra.mxu0 0.0
        %466 = vmatprep.subr.mxu0 0.0
        %467 = vmatpush1.msra.mxu0 0.0
        %468 = vmatprep.subr.mxu0 0.0
        %469 = vmatpush1.msra.mxu0 0.0
        %470 = vmatprep.subr.mxu0 0.0
        %471 = vmatpush1.msra.mxu0 0.0
        %472 = vmatprep.subr.mxu0 0.0
        %473 = vmatpush1.msra.mxu0 0.0
        %474 = vmatprep.subr.mxu0 0.0
        %475 = vmatpush1.msra.mxu0 0.0
        %476 = vmatprep.subr.mxu0 0.0
        %477 = vmatpush1.msra.mxu0 0.0
        %478 = vmatprep.subr.mxu0 0.0
        %479 = vmatpush1.msra.mxu0 0.0
        %480 = vmatprep.subr.mxu0 0.0
        %481 = vmatpush1.msra.mxu0 0.0
        %482 = vmatprep.subr.mxu0 0.0
        %483 = vmatpush1.msra.mxu0 0.0
        %484 = vmatprep.subr.mxu0 0.0
        %485 = vmatpush1.msra.mxu0 0.0
        %486 = vmatprep.subr.mxu0 0.0
        %487 = vmatpush1.msra.mxu0 0.0
        %488 = vmatprep.subr.mxu0 0.0
        %489 = vmatpush1.msra.mxu0 0.0
        %490 = vmatprep.subr.mxu0 0.0
        %491 = vmatpush1.msra.mxu0 0.0
        %492 = vmatprep.subr.mxu0 0.0
        %493 = vmatpush1.msra.mxu0 0.0
        %494 = vmatprep.mubr.f32.mxu0 0.0
        %495 = vmatmul.mubr.f32.gmra.mrb[0].mxu0 %v344
        %v496 = vpop.f32.mrb[0].mxu0
        %v497 = vadd.f32 %v340, %v496
        %v498 = vpop.f32.mrb[0].mxu0
        %v499 = vadd.f32 %v340, %v498
        %500 = vdwg.mxu0
        %v501 = vmax.f32 %v426, 0.0
        %v502 = vmax.f32 %v428, 0.0
        %v503 = vmax.f32 %v497, 0.0
        %v504 = vmax.f32 %v499, 0.0
        %s505 = scalar_lea.vmem %s291, 128 [#allocation2]
        %v506 = vld [vmem:[%s505] sm:$0xff]
        %v507 = vld [vmem:[%s505 + $0x8] sm:$0xff]
        %v508 = vld [vmem:[%s505 + $0x10] sm:$0xff]
        %v509 = vld [vmem:[%s505 + $0x18] sm:$0xff]
        %v510 = vld [vmem:[%s505 + $0x20] sm:$0xff]
        %v511 = vld [vmem:[%s505 + $0x28] sm:$0xff]
        %v512 = vld [vmem:[%s505 + $0x30] sm:$0xff]
        %v513 = vld [vmem:[%s505 + $0x38] sm:$0xff]
        %v514 = vld [vmem:[%s505 + $0x40] sm:$0xff]
        %v515 = vld [vmem:[%s505 + $0x48] sm:$0xff]
        %v516 = vld [vmem:[%s505 + $0x50] sm:$0xff]
        %v517 = vld [vmem:[%s505 + $0x58] sm:$0xff]
        %v518 = vld [vmem:[%s505 + $0x60] sm:$0x1]
        %v519 = vld [vmem:[%s505 + $0x68] sm:$0x1]
        %v520 = vld [vmem:[%s505 + $0x70] sm:$0x1]
        %v521 = vld [vmem:[%s505 + $0x78] sm:$0x1]
        %v523 = vsel %vm346, %v518, 0
        %v526 = vsel %vm346, %v519, 0
        %v529 = vsel %vm346, %v520, 0
        %v532 = vsel %vm346, %v521, 0
        %534 = vmatprep.subr.mxu0 %v507
        %535 = vmatpush1.msra.mxu0 %v506
        %536 = vmatprep.subr.mxu0 %v511
        %537 = vmatpush1.msra.mxu0 %v510
        %538 = vmatprep.subr.mxu0 %v515
        %539 = vmatpush1.msra.mxu0 %v514
        %540 = vmatprep.subr.mxu0 %v526
        %541 = vmatpush1.msra.mxu0 %v523
        %542 = vmatprep.subr.mxu0 0.0
        %543 = vmatpush1.msra.mxu0 0.0
        %544 = vmatprep.subr.mxu0 0.0
        %545 = vmatpush1.msra.mxu0 0.0
        %546 = vmatprep.subr.mxu0 0.0
        %547 = vmatpush1.msra.mxu0 0.0
        %548 = vmatprep.subr.mxu0 0.0
        %549 = vmatpush1.msra.mxu0 0.0
        %550 = vmatprep.subr.mxu0 0.0
        %551 = vmatpush1.msra.mxu0 0.0
        %552 = vmatprep.subr.mxu0 0.0
        %553 = vmatpush1.msra.mxu0 0.0
        %554 = vmatprep.subr.mxu0 0.0
        %555 = vmatpush1.msra.mxu0 0.0
        %556 = vmatprep.subr.mxu0 0.0
        %557 = vmatpush1.msra.mxu0 0.0
        %558 = vmatprep.subr.mxu0 0.0
        %559 = vmatpush1.msra.mxu0 0.0
        %560 = vmatprep.subr.mxu0 0.0
        %561 = vmatpush1.msra.mxu0 0.0
        %562 = vmatprep.subr.mxu0 0.0
        %563 = vmatpush1.msra.mxu0 0.0
        %564 = vmatprep.subr.mxu0 0.0
        %565 = vmatpush1.msra.mxu0 0.0
        %566 = vmatprep.subr.mxu0 0.0
        %567 = vmatpush1.msra.mxu0 0.0
        %568 = vmatprep.subr.mxu0 0.0
        %569 = vmatpush1.msra.mxu0 0.0
        %570 = vmatprep.subr.mxu0 0.0
        %571 = vmatpush1.msra.mxu0 0.0
        %572 = vmatprep.subr.mxu0 0.0
        %573 = vmatpush1.msra.mxu0 0.0
        %574 = vmatprep.subr.mxu0 0.0
        %575 = vmatpush1.msra.mxu0 0.0
        %576 = vmatprep.subr.mxu0 0.0
        %577 = vmatpush1.msra.mxu0 0.0
        %578 = vmatprep.subr.mxu0 0.0
        %579 = vmatpush1.msra.mxu0 0.0
        %580 = vmatprep.subr.mxu0 0.0
        %581 = vmatpush1.msra.mxu0 0.0
        %582 = vmatprep.subr.mxu0 0.0
        %583 = vmatpush1.msra.mxu0 0.0
        %584 = vmatprep.subr.mxu0 0.0
        %585 = vmatpush1.msra.mxu0 0.0
        %586 = vmatprep.subr.mxu0 0.0
        %587 = vmatpush1.msra.mxu0 0.0
        %588 = vmatprep.subr.mxu0 0.0
        %589 = vmatpush1.msra.mxu0 0.0
        %590 = vmatprep.subr.mxu0 0.0
        %591 = vmatpush1.msra.mxu0 0.0
        %592 = vmatprep.subr.mxu0 0.0
        %593 = vmatpush1.msra.mxu0 0.0
        %594 = vmatprep.subr.mxu0 0.0
        %595 = vmatpush1.msra.mxu0 0.0
        %596 = vmatprep.subr.mxu0 0.0
        %597 = vmatpush1.msra.mxu0 0.0
        %598 = vmatprep.mubr.f32.mxu0 0.0
        %599 = vmatmul.mubr.f32.gmra.mrb[0].mxu0 %v344
        %v600 = vpop.f32.mrb[0].mxu0
        %v601 = vadd.f32 %v340, %v600
        %v602 = vpop.f32.mrb[0].mxu0
        %v603 = vadd.f32 %v340, %v602
        %604 = vdwg.mxu0
        %605 = vmatprep.subr.mxu0 %v509
        %606 = vmatpush1.msra.mxu0 %v508
        %607 = vmatprep.subr.mxu0 %v513
        %608 = vmatpush1.msra.mxu0 %v512
        %609 = vmatprep.subr.mxu0 %v517
        %610 = vmatpush1.msra.mxu0 %v516
        %611 = vmatprep.subr.mxu0 %v532
        %612 = vmatpush1.msra.mxu0 %v529
        %613 = vmatprep.subr.mxu0 0.0
        %614 = vmatpush1.msra.mxu0 0.0
        %615 = vmatprep.subr.mxu0 0.0
        %616 = vmatpush1.msra.mxu0 0.0
        %617 = vmatprep.subr.mxu0 0.0
        %618 = vmatpush1.msra.mxu0 0.0
        %619 = vmatprep.subr.mxu0 0.0
        %620 = vmatpush1.msra.mxu0 0.0
        %621 = vmatprep.subr.mxu0 0.0
        %622 = vmatpush1.msra.mxu0 0.0
        %623 = vmatprep.subr.mxu0 0.0
        %624 = vmatpush1.msra.mxu0 0.0
        %625 = vmatprep.subr.mxu0 0.0
        %626 = vmatpush1.msra.mxu0 0.0
        %627 = vmatprep.subr.mxu0 0.0
        %628 = vmatpush1.msra.mxu0 0.0
        %629 = vmatprep.subr.mxu0 0.0
        %630 = vmatpush1.msra.mxu0 0.0
        %631 = vmatprep.subr.mxu0 0.0
        %632 = vmatpush1.msra.mxu0 0.0
        %633 = vmatprep.subr.mxu0 0.0
        %634 = vmatpush1.msra.mxu0 0.0
        %635 = vmatprep.subr.mxu0 0.0
        %636 = vmatpush1.msra.mxu0 0.0
        %637 = vmatprep.subr.mxu0 0.0
        %638 = vmatpush1.msra.mxu0 0.0
        %639 = vmatprep.subr.mxu0 0.0
        %640 = vmatpush1.msra.mxu0 0.0
        %641 = vmatprep.subr.mxu0 0.0
        %642 = vmatpush1.msra.mxu0 0.0
        %643 = vmatprep.subr.mxu0 0.0
        %644 = vmatpush1.msra.mxu0 0.0
        %645 = vmatprep.subr.mxu0 0.0
        %646 = vmatpush1.msra.mxu0 0.0
        %647 = vmatprep.subr.mxu0 0.0
        %648 = vmatpush1.msra.mxu0 0.0
        %649 = vmatprep.subr.mxu0 0.0
        %650 = vmatpush1.msra.mxu0 0.0
        %651 = vmatprep.subr.mxu0 0.0
        %652 = vmatpush1.msra.mxu0 0.0
        %653 = vmatprep.subr.mxu0 0.0
        %654 = vmatpush1.msra.mxu0 0.0
        %655 = vmatprep.subr.mxu0 0.0
        %656 = vmatpush1.msra.mxu0 0.0
        %657 = vmatprep.subr.mxu0 0.0
        %658 = vmatpush1.msra.mxu0 0.0
        %659 = vmatprep.subr.mxu0 0.0
        %660 = vmatpush1.msra.mxu0 0.0
        %661 = vmatprep.subr.mxu0 0.0
        %662 = vmatpush1.msra.mxu0 0.0
        %663 = vmatprep.subr.mxu0 0.0
        %664 = vmatpush1.msra.mxu0 0.0
        %665 = vmatprep.subr.mxu0 0.0
        %666 = vmatpush1.msra.mxu0 0.0
        %667 = vmatprep.subr.mxu0 0.0
        %668 = vmatpush1.msra.mxu0 0.0
        %669 = vmatprep.mubr.f32.mxu0 0.0
        %670 = vmatmul.mubr.f32.gmra.mrb[0].mxu0 %v344
        %v671 = vpop.f32.mrb[0].mxu0
        %v672 = vadd.f32 %v340, %v671
        %v673 = vpop.f32.mrb[0].mxu0
        %v674 = vadd.f32 %v340, %v673
        %675 = vdwg.mxu0
        %v676 = vmax.f32 %v601, 0.0
        %v677 = vmax.f32 %v603, 0.0
        %v678 = vmax.f32 %v672, 0.0
        %v679 = vmax.f32 %v674, 0.0
        %v680 = vmax.f32 %v501, %v676
        %v681 = vmax.f32 %v502, %v677
        %v682 = vmax.f32 %v503, %v678
        %v683 = vmax.f32 %v504, %v679
        %s684 = scalar_lea.vmem %s291, 256 [#allocation2]
        %v685 = vld [vmem:[%s684] sm:$0xff]
        %v686 = vld [vmem:[%s684 + $0x8] sm:$0xff]
        %v687 = vld [vmem:[%s684 + $0x10] sm:$0xff]
        %v688 = vld [vmem:[%s684 + $0x18] sm:$0xff]
        %v689 = vld [vmem:[%s684 + $0x20] sm:$0xff]
        %v690 = vld [vmem:[%s684 + $0x28] sm:$0xff]
        %v691 = vld [vmem:[%s684 + $0x30] sm:$0xff]
        %v692 = vld [vmem:[%s684 + $0x38] sm:$0xff]
        %v693 = vld [vmem:[%s684 + $0x40] sm:$0xff]
        %v694 = vld [vmem:[%s684 + $0x48] sm:$0xff]
        %v695 = vld [vmem:[%s684 + $0x50] sm:$0xff]
        %v696 = vld [vmem:[%s684 + $0x58] sm:$0xff]
        %v697 = vld [vmem:[%s684 + $0x60] sm:$0x1]
        %v698 = vld [vmem:[%s684 + $0x68] sm:$0x1]
        %v699 = vld [vmem:[%s684 + $0x70] sm:$0x1]
        %v700 = vld [vmem:[%s684 + $0x78] sm:$0x1]
        %v702 = vsel %vm346, %v697, 0
        %v705 = vsel %vm346, %v698, 0
        %v708 = vsel %vm346, %v699, 0
        %v711 = vsel %vm346, %v700, 0
        %713 = vmatprep.subr.mxu0 %v686
        %714 = vmatpush1.msra.mxu0 %v685
        %715 = vmatprep.subr.mxu0 %v690
        %716 = vmatpush1.msra.mxu0 %v689
        %717 = vmatprep.subr.mxu0 %v694
        %718 = vmatpush1.msra.mxu0 %v693
        %719 = vmatprep.subr.mxu0 %v705
        %720 = vmatpush1.msra.mxu0 %v702
        %721 = vmatprep.subr.mxu0 0.0
        %722 = vmatpush1.msra.mxu0 0.0
        %723 = vmatprep.subr.mxu0 0.0
        %724 = vmatpush1.msra.mxu0 0.0
        %725 = vmatprep.subr.mxu0 0.0
        %726 = vmatpush1.msra.mxu0 0.0
        %727 = vmatprep.subr.mxu0 0.0
        %728 = vmatpush1.msra.mxu0 0.0
        %729 = vmatprep.subr.mxu0 0.0
        %730 = vmatpush1.msra.mxu0 0.0
        %731 = vmatprep.subr.mxu0 0.0
        %732 = vmatpush1.msra.mxu0 0.0
        %733 = vmatprep.subr.mxu0 0.0
        %734 = vmatpush1.msra.mxu0 0.0
        %735 = vmatprep.subr.mxu0 0.0
        %736 = vmatpush1.msra.mxu0 0.0
        %737 = vmatprep.subr.mxu0 0.0
        %738 = vmatpush1.msra.mxu0 0.0
        %739 = vmatprep.subr.mxu0 0.0
        %740 = vmatpush1.msra.mxu0 0.0
        %741 = vmatprep.subr.mxu0 0.0
        %742 = vmatpush1.msra.mxu0 0.0
        %743 = vmatprep.subr.mxu0 0.0
        %744 = vmatpush1.msra.mxu0 0.0
        %745 = vmatprep.subr.mxu0 0.0
        %746 = vmatpush1.msra.mxu0 0.0
        %747 = vmatprep.subr.mxu0 0.0
        %748 = vmatpush1.msra.mxu0 0.0
        %749 = vmatprep.subr.mxu0 0.0
        %750 = vmatpush1.msra.mxu0 0.0
        %751 = vmatprep.subr.mxu0 0.0
        %752 = vmatpush1.msra.mxu0 0.0
        %753 = vmatprep.subr.mxu0 0.0
        %754 = vmatpush1.msra.mxu0 0.0
        %755 = vmatprep.subr.mxu0 0.0
        %756 = vmatpush1.msra.mxu0 0.0
        %757 = vmatprep.subr.mxu0 0.0
        %758 = vmatpush1.msra.mxu0 0.0
        %759 = vmatprep.subr.mxu0 0.0
        %760 = vmatpush1.msra.mxu0 0.0
        %761 = vmatprep.subr.mxu0 0.0
        %762 = vmatpush1.msra.mxu0 0.0
        %763 = vmatprep.subr.mxu0 0.0
        %764 = vmatpush1.msra.mxu0 0.0
        %765 = vmatprep.subr.mxu0 0.0
        %766 = vmatpush1.msra.mxu0 0.0
        %767 = vmatprep.subr.mxu0 0.0
        %768 = vmatpush1.msra.mxu0 0.0
        %769 = vmatprep.subr.mxu0 0.0
        %770 = vmatpush1.msra.mxu0 0.0
        %771 = vmatprep.subr.mxu0 0.0
        %772 = vmatpush1.msra.mxu0 0.0
        %773 = vmatprep.subr.mxu0 0.0
        %774 = vmatpush1.msra.mxu0 0.0
        %775 = vmatprep.subr.mxu0 0.0
        %776 = vmatpush1.msra.mxu0 0.0
        %777 = vmatprep.mubr.f32.mxu0 0.0
        %778 = vmatmul.mubr.f32.gmra.mrb[0].mxu0 %v344
        %v779 = vpop.f32.mrb[0].mxu0
        %v780 = vadd.f32 %v340, %v779
        %v781 = vpop.f32.mrb[0].mxu0
        %v782 = vadd.f32 %v340, %v781
        %783 = vdwg.mxu0
        %784 = vmatprep.subr.mxu0 %v688
        %785 = vmatpush1.msra.mxu0 %v687
        %786 = vmatprep.subr.mxu0 %v692
        %787 = vmatpush1.msra.mxu0 %v691
        %788 = vmatprep.subr.mxu0 %v696
        %789 = vmatpush1.msra.mxu0 %v695
        %790 = vmatprep.subr.mxu0 %v711
        %791 = vmatpush1.msra.mxu0 %v708
        %792 = vmatprep.subr.mxu0 0.0
        %793 = vmatpush1.msra.mxu0 0.0
        %794 = vmatprep.subr.mxu0 0.0
        %795 = vmatpush1.msra.mxu0 0.0
        %796 = vmatprep.subr.mxu0 0.0
        %797 = vmatpush1.msra.mxu0 0.0
        %798 = vmatprep.subr.mxu0 0.0
        %799 = vmatpush1.msra.mxu0 0.0
        %800 = vmatprep.subr.mxu0 0.0
        %801 = vmatpush1.msra.mxu0 0.0
        %802 = vmatprep.subr.mxu0 0.0
        %803 = vmatpush1.msra.mxu0 0.0
        %804 = vmatprep.subr.mxu0 0.0
        %805 = vmatpush1.msra.mxu0 0.0
        %806 = vmatprep.subr.mxu0 0.0
        %807 = vmatpush1.msra.mxu0 0.0
        %808 = vmatprep.subr.mxu0 0.0
        %809 = vmatpush1.msra.mxu0 0.0
        %810 = vmatprep.subr.mxu0 0.0
        %811 = vmatpush1.msra.mxu0 0.0
        %812 = vmatprep.subr.mxu0 0.0
        %813 = vmatpush1.msra.mxu0 0.0
        %814 = vmatprep.subr.mxu0 0.0
        %815 = vmatpush1.msra.mxu0 0.0
        %816 = vmatprep.subr.mxu0 0.0
        %817 = vmatpush1.msra.mxu0 0.0
        %818 = vmatprep.subr.mxu0 0.0
        %819 = vmatpush1.msra.mxu0 0.0
        %820 = vmatprep.subr.mxu0 0.0
        %821 = vmatpush1.msra.mxu0 0.0
        %822 = vmatprep.subr.mxu0 0.0
        %823 = vmatpush1.msra.mxu0 0.0
        %824 = vmatprep.subr.mxu0 0.0
        %825 = vmatpush1.msra.mxu0 0.0
        %826 = vmatprep.subr.mxu0 0.0
        %827 = vmatpush1.msra.mxu0 0.0
        %828 = vmatprep.subr.mxu0 0.0
        %829 = vmatpush1.msra.mxu0 0.0
        %830 = vmatprep.subr.mxu0 0.0
        %831 = vmatpush1.msra.mxu0 0.0
        %832 = vmatprep.subr.mxu0 0.0
        %833 = vmatpush1.msra.mxu0 0.0
        %834 = vmatprep.subr.mxu0 0.0
        %835 = vmatpush1.msra.mxu0 0.0
        %836 = vmatprep.subr.mxu0 0.0
        %837 = vmatpush1.msra.mxu0 0.0
        %838 = vmatprep.subr.mxu0 0.0
        %839 = vmatpush1.msra.mxu0 0.0
        %840 = vmatprep.subr.mxu0 0.0
        %841 = vmatpush1.msra.mxu0 0.0
        %842 = vmatprep.subr.mxu0 0.0
        %843 = vmatpush1.msra.mxu0 0.0
        %844 = vmatprep.subr.mxu0 0.0
        %845 = vmatpush1.msra.mxu0 0.0
        %846 = vmatprep.subr.mxu0 0.0
        %847 = vmatpush1.msra.mxu0 0.0
        %848 = vmatprep.mubr.f32.mxu0 0.0
        %849 = vmatmul.mubr.f32.gmra.mrb[0].mxu0 %v344
        %v850 = vpop.f32.mrb[0].mxu0
        %v851 = vadd.f32 %v340, %v850
        %v852 = vpop.f32.mrb[0].mxu0
        %v853 = vadd.f32 %v340, %v852
        %854 = vdwg.mxu0
        %v855 = vmax.f32 %v780, 0.0
        %v856 = vmax.f32 %v782, 0.0
        %v857 = vmax.f32 %v851, 0.0
        %v858 = vmax.f32 %v853, 0.0
        %v859 = vmax.f32 %v680, %v855
        %v860 = vmax.f32 %v681, %v856
        %v861 = vmax.f32 %v682, %v857
        %v862 = vmax.f32 %v683, %v858
        %s863 = scalar_lea.vmem %s291, 384 [#allocation2]
        %v864 = vld [vmem:[%s863] sm:$0xff]
        %v865 = vld [vmem:[%s863 + $0x8] sm:$0xff]
        %v866 = vld [vmem:[%s863 + $0x10] sm:$0xff]
        %v867 = vld [vmem:[%s863 + $0x18] sm:$0xff]
        %v868 = vld [vmem:[%s863 + $0x20] sm:$0xff]
        %v869 = vld [vmem:[%s863 + $0x28] sm:$0xff]
        %v870 = vld [vmem:[%s863 + $0x30] sm:$0xff]
        %v871 = vld [vmem:[%s863 + $0x38] sm:$0xff]
        %v872 = vld [vmem:[%s863 + $0x40] sm:$0xff]
        %v873 = vld [vmem:[%s863 + $0x48] sm:$0xff]
        %v874 = vld [vmem:[%s863 + $0x50] sm:$0xff]
        %v875 = vld [vmem:[%s863 + $0x58] sm:$0xff]
        %v876 = vld [vmem:[%s863 + $0x60] sm:$0x1]
        %v877 = vld [vmem:[%s863 + $0x68] sm:$0x1]
        %v878 = vld [vmem:[%s863 + $0x70] sm:$0x1]
        %v879 = vld [vmem:[%s863 + $0x78] sm:$0x1]
        %v881 = vsel %vm346, %v876, 0
        %v884 = vsel %vm346, %v877, 0
        %v887 = vsel %vm346, %v878, 0
        %v890 = vsel %vm346, %v879, 0
        %892 = vmatprep.subr.mxu0 %v865
        %893 = vmatpush1.msra.mxu0 %v864
        %894 = vmatprep.subr.mxu0 %v869
        %895 = vmatpush1.msra.mxu0 %v868
        %896 = vmatprep.subr.mxu0 %v873
        %897 = vmatpush1.msra.mxu0 %v872
        %898 = vmatprep.subr.mxu0 %v884
        %899 = vmatpush1.msra.mxu0 %v881
        %900 = vmatprep.subr.mxu0 0.0
        %901 = vmatpush1.msra.mxu0 0.0
        %902 = vmatprep.subr.mxu0 0.0
        %903 = vmatpush1.msra.mxu0 0.0
        %904 = vmatprep.subr.mxu0 0.0
        %905 = vmatpush1.msra.mxu0 0.0
        %906 = vmatprep.subr.mxu0 0.0
        %907 = vmatpush1.msra.mxu0 0.0
        %908 = vmatprep.subr.mxu0 0.0
        %909 = vmatpush1.msra.mxu0 0.0
        %910 = vmatprep.subr.mxu0 0.0
        %911 = vmatpush1.msra.mxu0 0.0
        %912 = vmatprep.subr.mxu0 0.0
        %913 = vmatpush1.msra.mxu0 0.0
        %914 = vmatprep.subr.mxu0 0.0
        %915 = vmatpush1.msra.mxu0 0.0
        %916 = vmatprep.subr.mxu0 0.0
        %917 = vmatpush1.msra.mxu0 0.0
        %918 = vmatprep.subr.mxu0 0.0
        %919 = vmatpush1.msra.mxu0 0.0
        %920 = vmatprep.subr.mxu0 0.0
        %921 = vmatpush1.msra.mxu0 0.0
        %922 = vmatprep.subr.mxu0 0.0
        %923 = vmatpush1.msra.mxu0 0.0
        %924 = vmatprep.subr.mxu0 0.0
        %925 = vmatpush1.msra.mxu0 0.0
        %926 = vmatprep.subr.mxu0 0.0
        %927 = vmatpush1.msra.mxu0 0.0
        %928 = vmatprep.subr.mxu0 0.0
        %929 = vmatpush1.msra.mxu0 0.0
        %930 = vmatprep.subr.mxu0 0.0
        %931 = vmatpush1.msra.mxu0 0.0
        %932 = vmatprep.subr.mxu0 0.0
        %933 = vmatpush1.msra.mxu0 0.0
        %934 = vmatprep.subr.mxu0 0.0
        %935 = vmatpush1.msra.mxu0 0.0
        %936 = vmatprep.subr.mxu0 0.0
        %937 = vmatpush1.msra.mxu0 0.0
        %938 = vmatprep.subr.mxu0 0.0
        %939 = vmatpush1.msra.mxu0 0.0
        %940 = vmatprep.subr.mxu0 0.0
        %941 = vmatpush1.msra.mxu0 0.0
        %942 = vmatprep.subr.mxu0 0.0
        %943 = vmatpush1.msra.mxu0 0.0
        %944 = vmatprep.subr.mxu0 0.0
        %945 = vmatpush1.msra.mxu0 0.0
        %946 = vmatprep.subr.mxu0 0.0
        %947 = vmatpush1.msra.mxu0 0.0
        %948 = vmatprep.subr.mxu0 0.0
        %949 = vmatpush1.msra.mxu0 0.0
        %950 = vmatprep.subr.mxu0 0.0
        %951 = vmatpush1.msra.mxu0 0.0
        %952 = vmatprep.subr.mxu0 0.0
        %953 = vmatpush1.msra.mxu0 0.0
        %954 = vmatprep.subr.mxu0 0.0
        %955 = vmatpush1.msra.mxu0 0.0
        %956 = vmatprep.mubr.f32.mxu0 0.0
        %957 = vmatmul.mubr.f32.gmra.mrb[0].mxu0 %v344
        %v958 = vpop.f32.mrb[0].mxu0
        %v959 = vadd.f32 %v340, %v958
        %v960 = vpop.f32.mrb[0].mxu0
        %v961 = vadd.f32 %v340, %v960
        %962 = vdwg.mxu0
        %963 = vmatprep.subr.mxu0 %v867
        %964 = vmatpush1.msra.mxu0 %v866
        %965 = vmatprep.subr.mxu0 %v871
        %966 = vmatpush1.msra.mxu0 %v870
        %967 = vmatprep.subr.mxu0 %v875
        %968 = vmatpush1.msra.mxu0 %v874
        %969 = vmatprep.subr.mxu0 %v890
        %970 = vmatpush1.msra.mxu0 %v887
        %971 = vmatprep.subr.mxu0 0.0
        %972 = vmatpush1.msra.mxu0 0.0
        %973 = vmatprep.subr.mxu0 0.0
        %974 = vmatpush1.msra.mxu0 0.0
        %975 = vmatprep.subr.mxu0 0.0
        %976 = vmatpush1.msra.mxu0 0.0
        %977 = vmatprep.subr.mxu0 0.0
        %978 = vmatpush1.msra.mxu0 0.0
        %979 = vmatprep.subr.mxu0 0.0
        %980 = vmatpush1.msra.mxu0 0.0
        %981 = vmatprep.subr.mxu0 0.0
        %982 = vmatpush1.msra.mxu0 0.0
        %983 = vmatprep.subr.mxu0 0.0
        %984 = vmatpush1.msra.mxu0 0.0
        %985 = vmatprep.subr.mxu0 0.0
        %986 = vmatpush1.msra.mxu0 0.0
        %987 = vmatprep.subr.mxu0 0.0
        %988 = vmatpush1.msra.mxu0 0.0
        %989 = vmatprep.subr.mxu0 0.0
        %990 = vmatpush1.msra.mxu0 0.0
        %991 = vmatprep.subr.mxu0 0.0
        %992 = vmatpush1.msra.mxu0 0.0
        %993 = vmatprep.subr.mxu0 0.0
        %994 = vmatpush1.msra.mxu0 0.0
        %995 = vmatprep.subr.mxu0 0.0
        %996 = vmatpush1.msra.mxu0 0.0
        %997 = vmatprep.subr.mxu0 0.0
        %998 = vmatpush1.msra.mxu0 0.0
        %999 = vmatprep.subr.mxu0 0.0
        %1000 = vmatpush1.msra.mxu0 0.0
        %1001 = vmatprep.subr.mxu0 0.0
        %1002 = vmatpush1.msra.mxu0 0.0
        %1003 = vmatprep.subr.mxu0 0.0
        %1004 = vmatpush1.msra.mxu0 0.0
        %1005 = vmatprep.subr.mxu0 0.0
        %1006 = vmatpush1.msra.mxu0 0.0
        %1007 = vmatprep.subr.mxu0 0.0
        %1008 = vmatpush1.msra.mxu0 0.0
        %1009 = vmatprep.subr.mxu0 0.0
        %1010 = vmatpush1.msra.mxu0 0.0
        %1011 = vmatprep.subr.mxu0 0.0
        %1012 = vmatpush1.msra.mxu0 0.0
        %1013 = vmatprep.subr.mxu0 0.0
        %1014 = vmatpush1.msra.mxu0 0.0
        %1015 = vmatprep.subr.mxu0 0.0
        %1016 = vmatpush1.msra.mxu0 0.0
        %1017 = vmatprep.subr.mxu0 0.0
        %1018 = vmatpush1.msra.mxu0 0.0
        %1019 = vmatprep.subr.mxu0 0.0
        %1020 = vmatpush1.msra.mxu0 0.0
        %1021 = vmatprep.subr.mxu0 0.0
        %1022 = vmatpush1.msra.mxu0 0.0
        %1023 = vmatprep.subr.mxu0 0.0
        %1024 = vmatpush1.msra.mxu0 0.0
        %1025 = vmatprep.subr.mxu0 0.0
        %1026 = vmatpush1.msra.mxu0 0.0
        %1027 = vmatprep.mubr.f32.mxu0 0.0
        %1028 = vmatmul.mubr.f32.gmra.mrb[0].mxu0 %v344
        %v1029 = vpop.f32.mrb[0].mxu0
        %v1030 = vadd.f32 %v340, %v1029
        %v1031 = vpop.f32.mrb[0].mxu0
        %v1032 = vadd.f32 %v340, %v1031
        %1033 = vdwg.mxu0
        %v1034 = vmax.f32 %v959, 0.0
        %v1035 = vmax.f32 %v961, 0.0
        %v1036 = vmax.f32 %v1030, 0.0
        %v1037 = vmax.f32 %v1032, 0.0
        %v1038 = vmax.f32 %v859, %v1034
        %v1039 = vmax.f32 %v860, %v1035
        %v1040 = vmax.f32 %v861, %v1036
        %v1041 = vmax.f32 %v862, %v1037
        %1042 = vst [vmem:[%s317] sm:$0x3f] %v1038
        %1043 = vst [vmem:[%s317 + $0x8] sm:$0x3f] %v1039
        %1044 = vst [vmem:[%s317 + $0x10] sm:$0x3f] %v1040
        %1045 = vst [vmem:[%s317 + $0x18] sm:$0x3f] %v1041
        %s1046 = smul.u32 4, %s14
        %p1047 = scmp.lt.s32.totalorder %s1046, 11
        %s1048 = scalar_select %p1047, %s1046, 11
        %s1049 = smul.addr %s1048, 8
        %s1050 = scalar_lea.vmem %s3, %s1049
        // Predicated region
        $region56: #{gate_cnn_fashion_softmax.3} parent=50 // pred_check
          %p1051 = pneg %p100
        $region57: #{gate_cnn_fashion_softmax.3} parent=50 // pred_check_branch
          %1053 = sbr.rel (%p1051) target = $region59
        $region58: #{gate_cnn_fashion_softmax.3} parent=50 // pred_region
          %s1054 = smul.u32 4, %s14
        $region59: #{gate_cnn_fashion_softmax.3} parent=50 // pred_fallthru
          _
      $region51: #{gate_cnn_fashion_softmax.3} parent=5 // pred_fallthru
        _
      %p1055 = scmp.le.s32.totalorder 2, %s9
      // Predicated region
      $region60: #{gate_cnn_fashion_softmax.3} parent=5 // pred_check
        %p1056 = pneg %p1055
      $region61: #{gate_cnn_fashion_softmax.3} parent=5 // pred_check_branch
        %1058 = sbr.rel (%p1056) target = $region63
      $region62: #{gate_cnn_fashion_softmax.3} parent=5 // pred_region
        %s1059 = ssub.s32 %s9, 2
        // Predicated region
        $region64: #{gate_cnn_fashion_softmax.3} parent=62 // pred_check
          %p1060 = pneg %p106
        $region65: #{gate_cnn_fashion_softmax.3} parent=62 // pred_check_branch
          %1062 = sbr.rel (%p1060) target = $region67
        $region66: #{gate_cnn_fashion_softmax.3} parent=62 // pred_region
          %s1063 = smul.u32 4, %s15
          %p1064 = scmp.lt.s32.totalorder %s1063, 11
          %s1065 = scalar_select %p1064, %s1063, 11
          %s1066 = smul.addr %s1065, 8
          %s1067 = scalar_lea.vmem %s3, %s1066
        $region67: #{gate_cnn_fashion_softmax.3} parent=62 // pred_fallthru
          _
      $region63: #{gate_cnn_fashion_softmax.3} parent=5 // pred_fallthru
        _
    $region6: #{gate_cnn_fashion_softmax.3} parent=1 // loop_footer
      %s13 = sadd.s32 1, %s9
    $region7: #{gate_cnn_fashion_softmax.3} parent=1 // loop_footer_branch
      %8 = sbr.rel target = $region3
    $region8: #{gate_cnn_fashion_softmax.3} parent=1 // loop_exit
      _

// kernel: gate_cnn_fashion_softmax.4
$region0: #{gate_cnn_fashion_softmax.4}
  #allocation0 [shape = 'u32[]', space=smem, size = 0x4, offset = 0x4, fixed_abs, tag = 'smem constant byte address 0x4 - core index']
  #allocation1 [shape = 'u32[144,128]{1,0:T(1,128)}', space=vmem, size = 0x12000, scoped, tag = 'internal scratch']
  %s0 = inlined_call_operand.vmem [shape: f32[4,150,128], index: 0, kind: input, shape index: {}]
  %s1 = inlined_call_operand.vmem [shape: f32[12,150], index: 1, kind: input, shape index: {}]
  %s2 = inlined_call_operand.vmem [shape: f32[12,1], index: 2, kind: input, shape index: {}]
  %s3 = inlined_call_operand.vmem [shape: f32[12,128], index: 3, kind: output, shape index: {}]
  %s4 = sld [smem:[#allocation0]]
  $region22: #{gate_cnn_fashion_softmax.4} parent=0
    _
  %s6 = ssub.s32 1, %s4
  %s7 = scalar_select 0, %s6, %s4
  // Predicated region
  $region2: #{gate_cnn_fashion_softmax.4} parent=0 // pred_check
    _
  $region3: #{gate_cnn_fashion_softmax.4} parent=0 // pred_check_branch
    %9 = sbr.rel (0) target = $region5
  $region4: #{gate_cnn_fashion_softmax.4} parent=0 // pred_region
    _
  $region5: #{gate_cnn_fashion_softmax.4} parent=0 // pred_fallthru
    _
  // Predicated region
  $region6: #{gate_cnn_fashion_softmax.4} parent=0 // pred_check
    _
  $region7: #{gate_cnn_fashion_softmax.4} parent=0 // pred_check_branch
    %11 = sbr.rel (0) target = $region9
  $region8: #{gate_cnn_fashion_softmax.4} parent=0 // pred_region
    _
  $region9: #{gate_cnn_fashion_softmax.4} parent=0 // pred_fallthru
    _
  // Predicated region
  $region10: #{gate_cnn_fashion_softmax.4} parent=0 // pred_check
    _
  $region11: #{gate_cnn_fashion_softmax.4} parent=0 // pred_check_branch
    %13 = sbr.rel (0) target = $region13
  $region12: #{gate_cnn_fashion_softmax.4} parent=0 // pred_region
    _
  $region13: #{gate_cnn_fashion_softmax.4} parent=0 // pred_fallthru
    _
  %v14 = vld [vmem:[%s1] sm:$0xff]
  %v15 = vld [vmem:[%s1 + $0x8] sm:$0xff]
  %v16 = vld [vmem:[%s1 + $0x10] sm:$0xf]
  %v17 = vld [vmem:[%s1 + $0x18] sm:$0xf]
  %v18 = vld [vmem:[%s2] sm:$0xff]
  %v19 = vld [vmem:[%s2 + $0x8] sm:$0xf]
  %v20 = vld [vmem:[%s0] sm:$0xff]
  %v21 = vld [vmem:[%s0 + $0x8] sm:$0xff]
  %v22 = vld [vmem:[%s0 + $0x10] sm:$0xff]
  %v23 = vld [vmem:[%s0 + $0x18] sm:$0xff]
  %v24 = vld [vmem:[%s0 + $0x20] sm:$0xff]
  %v25 = vld [vmem:[%s0 + $0x28] sm:$0xff]
  %v26 = vld [vmem:[%s0 + $0x30] sm:$0xff]
  %v27 = vld [vmem:[%s0 + $0x38] sm:$0xff]
  %v28 = vld [vmem:[%s0 + $0x40] sm:$0xff]
  %v29 = vld [vmem:[%s0 + $0x48] sm:$0xff]
  %v30 = vld [vmem:[%s0 + $0x50] sm:$0xff]
  %v31 = vld [vmem:[%s0 + $0x58] sm:$0xff]
  %v32 = vld [vmem:[%s0 + $0x60] sm:$0xff]
  %v33 = vld [vmem:[%s0 + $0x68] sm:$0xff]
  %v34 = vld [vmem:[%s0 + $0x70] sm:$0xff]
  %v35 = vld [vmem:[%s0 + $0x78] sm:$0xff]
  %v36 = vld [vmem:[%s0 + $0x80] sm:$0xff]
  %v37 = vld [vmem:[%s0 + $0x88] sm:$0xff]
  %v38 = vld [vmem:[%s0 + $0x90] sm:$0x3f]
  %40 = vset.pattern.permute.xlu0 0
  %41 = vperm.xlu0 %40, %v18
  %v42 = vpop.permute.xlu0 %41
  %45 = vset.pattern.permute.xlu0 0
  %46 = vperm.xlu0 %45, %v19
  %v47 = vpop.permute.xlu0 %46
  %vm49 = vcmask 179200
  %v51 = vsel %vm49, %v15, 0
  %v54 = vsel %vm49, %v17, 0
  %vm56 = vcmask 1045504
  %v58 = vsel %vm56, %v38, 0
  %60 = vmatprep.subr.mxu0 0.0
  %61 = vmatpush1.msra.mxu0 %v20
  %62 = vmatprep.subr.mxu0 0.0
  %63 = vmatpush1.msra.mxu0 %v21
  %64 = vmatprep.subr.mxu0 0.0
  %65 = vmatpush1.msra.mxu0 %v22
  %66 = vmatprep.subr.mxu0 0.0
  %67 = vmatpush1.msra.mxu0 %v23
  %68 = vmatprep.subr.mxu0 0.0
  %69 = vmatpush1.msra.mxu0 %v24
  %70 = vmatprep.subr.mxu0 0.0
  %71 = vmatpush1.msra.mxu0 %v25
  %72 = vmatprep.subr.mxu0 0.0
  %73 = vmatpush1.msra.mxu0 %v26
  %74 = vmatprep.subr.mxu0 0.0
  %75 = vmatpush1.msra.mxu0 %v27
  %76 = vmatprep.subr.mxu0 0.0
  %77 = vmatpush1.msra.mxu0 %v28
  %78 = vmatprep.subr.mxu0 0.0
  %79 = vmatpush1.msra.mxu0 %v29
  %80 = vmatprep.subr.mxu0 0.0
  %81 = vmatpush1.msra.mxu0 %v30
  %82 = vmatprep.subr.mxu0 0.0
  %83 = vmatpush1.msra.mxu0 %v31
  %84 = vmatprep.subr.mxu0 0.0
  %85 = vmatpush1.msra.mxu0 %v32
  %86 = vmatprep.subr.mxu0 0.0
  %87 = vmatpush1.msra.mxu0 %v33
  %88 = vmatprep.subr.mxu0 0.0
  %89 = vmatpush1.msra.mxu0 %v34
  %90 = vmatprep.subr.mxu0 0.0
  %91 = vmatpush1.msra.mxu0 %v35
  %92 = vmatprep.subr.mxu0 0.0
  %93 = vmatpush1.msra.mxu0 %v36
  %94 = vmatprep.subr.mxu0 0.0
  %95 = vmatpush1.msra.mxu0 %v37
  %96 = vmatprep.subr.mxu0 0.0
  %97 = vmatpush1.msra.mxu0 %v58
  %98 = vmatprep.subr.mxu0 0.0
  %99 = vmatpush1.msra.mxu0 0.0
  %100 = vmatprep.subr.mxu0 0.0
  %101 = vmatpush1.msra.mxu0 0.0
  %102 = vmatprep.subr.mxu0 0.0
  %103 = vmatpush1.msra.mxu0 0.0
  %104 = vmatprep.subr.mxu0 0.0
  %105 = vmatpush1.msra.mxu0 0.0
  %106 = vmatprep.subr.mxu0 0.0
  %107 = vmatpush1.msra.mxu0 0.0
  %108 = vmatprep.subr.mxu0 0.0
  %109 = vmatpush1.msra.mxu0 0.0
  %110 = vmatprep.subr.mxu0 0.0
  %111 = vmatpush1.msra.mxu0 0.0
  %112 = vmatprep.subr.mxu0 0.0
  %113 = vmatpush1.msra.mxu0 0.0
  %114 = vmatprep.subr.mxu0 0.0
  %115 = vmatpush1.msra.mxu0 0.0
  %116 = vmatprep.subr.mxu0 0.0
  %117 = vmatpush1.msra.mxu0 0.0
  %118 = vmatprep.subr.mxu0 0.0
  %119 = vmatpush1.msra.mxu0 0.0
  %120 = vmatprep.subr.mxu0 0.0
  %121 = vmatpush1.msra.mxu0 0.0
  %122 = vmatprep.subr.mxu0 0.0
  %123 = vmatpush1.msra.mxu0 0.0
  %124 = vmatprep.mubr.f32.mxu0 %v51
  %125 = vmatmul.mubr.f32.gmra.mrb[0].mxu0 %v14
  %v126 = vpop.f32.mrb[0].mxu0
  %v127 = vadd.f32 %v42, %v126
  %v128 = vpop.f32.mrb[0].mxu0
  %129 = vmatprep.mubr.f32.mxu0 %v54
  %130 = vmatmul.mubr.f32.gmra.mrb[0].mxu0 %v16
  %v131 = vpop.f32.mrb[0].mxu0
  %v132 = vadd.f32 %v47, %v131
  %v133 = vpop.f32.mrb[0].mxu0
  %134 = vdwg.mxu0
  %v135 = vmax.f32 %v127, 0.0
  %v136 = vmax.f32 %v132, 0.0
  %s137 = scalar_lea.vmem %s0, 152
  %v138 = vld [vmem:[%s137] sm:$0xff]
  %v139 = vld [vmem:[%s137 + $0x8] sm:$0xff]
  %v140 = vld [vmem:[%s137 + $0x10] sm:$0xff]
  %v141 = vld [vmem:[%s137 + $0x18] sm:$0xff]
  %v142 = vld [vmem:[%s137 + $0x20] sm:$0xff]
  %v143 = vld [vmem:[%s137 + $0x28] sm:$0xff]
  %v144 = vld [vmem:[%s137 + $0x30] sm:$0xff]
  %v145 = vld [vmem:[%s137 + $0x38] sm:$0xff]
  %v146 = vld [vmem:[%s137 + $0x40] sm:$0xff]
  %v147 = vld [vmem:[%s137 + $0x48] sm:$0xff]
  %v148 = vld [vmem:[%s137 + $0x50] sm:$0xff]
  %v149 = vld [vmem:[%s137 + $0x58] sm:$0xff]
  %v150 = vld [vmem:[%s137 + $0x60] sm:$0xff]
  %v151 = vld [vmem:[%s137 + $0x68] sm:$0xff]
  %v152 = vld [vmem:[%s137 + $0x70] sm:$0xff]
  %v153 = vld [vmem:[%s137 + $0x78] sm:$0xff]
  %v154 = vld [vmem:[%s137 + $0x80] sm:$0xff]
  %v155 = vld [vmem:[%s137 + $0x88] sm:$0xff]
  %v156 = vld [vmem:[%s137 + $0x90] sm:$0x3f]
  %v158 = vsel %vm56, %v156, 0
  %160 = vmatprep.subr.mxu0 0.0
  %161 = vmatpush1.msra.mxu0 %v138
  %162 = vmatprep.subr.mxu0 0.0
  %163 = vmatpush1.msra.mxu0 %v139
  %164 = vmatprep.subr.mxu0 0.0
  %165 = vmatpush1.msra.mxu0 %v140
  %166 = vmatprep.subr.mxu0 0.0
  %167 = vmatpush1.msra.mxu0 %v141
  %168 = vmatprep.subr.mxu0 0.0
  %169 = vmatpush1.msra.mxu0 %v142
  %170 = vmatprep.subr.mxu0 0.0
  %171 = vmatpush1.msra.mxu0 %v143
  %172 = vmatprep.subr.mxu0 0.0
  %173 = vmatpush1.msra.mxu0 %v144
  %174 = vmatprep.subr.mxu0 0.0
  %175 = vmatpush1.msra.mxu0 %v145
  %176 = vmatprep.subr.mxu0 0.0
  %177 = vmatpush1.msra.mxu0 %v146
  %178 = vmatprep.subr.mxu0 0.0
  %179 = vmatpush1.msra.mxu0 %v147
  %180 = vmatprep.subr.mxu0 0.0
  %181 = vmatpush1.msra.mxu0 %v148
  %182 = vmatprep.subr.mxu0 0.0
  %183 = vmatpush1.msra.mxu0 %v149
  %184 = vmatprep.subr.mxu0 0.0
  %185 = vmatpush1.msra.mxu0 %v150
  %186 = vmatprep.subr.mxu0 0.0
  %187 = vmatpush1.msra.mxu0 %v151
  %188 = vmatprep.subr.mxu0 0.0
  %189 = vmatpush1.msra.mxu0 %v152
  %190 = vmatprep.subr.mxu0 0.0
  %191 = vmatpush1.msra.mxu0 %v153
  %192 = vmatprep.subr.mxu0 0.0
  %193 = vmatpush1.msra.mxu0 %v154
  %194 = vmatprep.subr.mxu0 0.0
  %195 = vmatpush1.msra.mxu0 %v155
  %196 = vmatprep.subr.mxu0 0.0
  %197 = vmatpush1.msra.mxu0 %v158
  %198 = vmatprep.subr.mxu0 0.0
  %199 = vmatpush1.msra.mxu0 0.0
  %200 = vmatprep.subr.mxu0 0.0
  %201 = vmatpush1.msra.mxu0 0.0
  %202 = vmatprep.subr.mxu0 0.0
  %203 = vmatpush1.msra.mxu0 0.0
  %204 = vmatprep.subr.mxu0 0.0
  %205 = vmatpush1.msra.mxu0 0.0
  %206 = vmatprep.subr.mxu0 0.0
  %207 = vmatpush1.msra.mxu0 0.0
  %208 = vmatprep.subr.mxu0 0.0
  %209 = vmatpush1.msra.mxu0 0.0
  %210 = vmatprep.subr.mxu0 0.0
  %211 = vmatpush1.msra.mxu0 0.0
  %212 = vmatprep.subr.mxu0 0.0
  %213 = vmatpush1.msra.mxu0 0.0
  %214 = vmatprep.subr.mxu0 0.0
  %215 = vmatpush1.msra.mxu0 0.0
  %216 = vmatprep.subr.mxu0 0.0
  %217 = vmatpush1.msra.mxu0 0.0
  %218 = vmatprep.subr.mxu0 0.0
  %219 = vmatpush1.msra.mxu0 0.0
  %220 = vmatprep.subr.mxu0 0.0
  %221 = vmatpush1.msra.mxu0 0.0
  %222 = vmatprep.subr.mxu0 0.0
  %223 = vmatpush1.msra.mxu0 0.0
  %224 = vmatprep.mubr.f32.mxu0 %v51
  %225 = vmatmul.mubr.f32.gmra.mrb[0].mxu0 %v14
  %v226 = vpop.f32.mrb[0].mxu0
  %v227 = vadd.f32 %v42, %v226
  %v228 = vpop.f32.mrb[0].mxu0
  %229 = vmatprep.mubr.f32.mxu0 %v54
  %230 = vmatmul.mubr.f32.gmra.mrb[0].mxu0 %v16
  %v231 = vpop.f32.mrb[0].mxu0
  %v232 = vadd.f32 %v47, %v231
  %v233 = vpop.f32.mrb[0].mxu0
  %234 = vdwg.mxu0
  %v235 = vmax.f32 %v227, 0.0
  %v236 = vmax.f32 %v232, 0.0
  %v237 = vmax.f32 %v135, %v235
  %v238 = vmax.f32 %v136, %v236
  %s239 = scalar_lea.vmem %s0, 304
  %v240 = vld [vmem:[%s239] sm:$0xff]
  %v241 = vld [vmem:[%s239 + $0x8] sm:$0xff]
  %v242 = vld [vmem:[%s239 + $0x10] sm:$0xff]
  %v243 = vld [vmem:[%s239 + $0x18] sm:$0xff]
  %v244 = vld [vmem:[%s239 + $0x20] sm:$0xff]
  %v245 = vld [vmem:[%s239 + $0x28] sm:$0xff]
  %v246 = vld [vmem:[%s239 + $0x30] sm:$0xff]
  %v247 = vld [vmem:[%s239 + $0x38] sm:$0xff]
  %v248 = vld [vmem:[%s239 + $0x40] sm:$0xff]
  %v249 = vld [vmem:[%s239 + $0x48] sm:$0xff]
  %v250 = vld [vmem:[%s239 + $0x50] sm:$0xff]
  %v251 = vld [vmem:[%s239 + $0x58] sm:$0xff]
  %v252 = vld [vmem:[%s239 + $0x60] sm:$0xff]
  %v253 = vld [vmem:[%s239 + $0x68] sm:$0xff]
  %v254 = vld [vmem:[%s239 + $0x70] sm:$0xff]
  %v255 = vld [vmem:[%s239 + $0x78] sm:$0xff]
  %v256 = vld [vmem:[%s239 + $0x80] sm:$0xff]
  %v257 = vld [vmem:[%s239 + $0x88] sm:$0xff]
  %v258 = vld [vmem:[%s239 + $0x90] sm:$0x3f]
  %v260 = vsel %vm56, %v258, 0
  %262 = vmatprep.subr.mxu0 0.0
  %263 = vmatpush1.msra.mxu0 %v240
  %264 = vmatprep.subr.mxu0 0.0
  %265 = vmatpush1.msra.mxu0 %v241
  %266 = vmatprep.subr.mxu0 0.0
  %267 = vmatpush1.msra.mxu0 %v242
  %268 = vmatprep.subr.mxu0 0.0
  %269 = vmatpush1.msra.mxu0 %v243
  %270 = vmatprep.subr.mxu0 0.0
  %271 = vmatpush1.msra.mxu0 %v244
  %272 = vmatprep.subr.mxu0 0.0
  %273 = vmatpush1.msra.mxu0 %v245
  %274 = vmatprep.subr.mxu0 0.0
  %275 = vmatpush1.msra.mxu0 %v246
  %276 = vmatprep.subr.mxu0 0.0
  %277 = vmatpush1.msra.mxu0 %v247
  %278 = vmatprep.subr.mxu0 0.0
  %279 = vmatpush1.msra.mxu0 %v248
  %280 = vmatprep.subr.mxu0 0.0
  %281 = vmatpush1.msra.mxu0 %v249
  %282 = vmatprep.subr.mxu0 0.0
  %283 = vmatpush1.msra.mxu0 %v250
  %284 = vmatprep.subr.mxu0 0.0
  %285 = vmatpush1.msra.mxu0 %v251
  %286 = vmatprep.subr.mxu0 0.0
  %287 = vmatpush1.msra.mxu0 %v252
  %288 = vmatprep.subr.mxu0 0.0
  %289 = vmatpush1.msra.mxu0 %v253
  %290 = vmatprep.subr.mxu0 0.0
  %291 = vmatpush1.msra.mxu0 %v254
  %292 = vmatprep.subr.mxu0 0.0
  %293 = vmatpush1.msra.mxu0 %v255
  %294 = vmatprep.subr.mxu0 0.0
  %295 = vmatpush1.msra.mxu0 %v256
  %296 = vmatprep.subr.mxu0 0.0
  %297 = vmatpush1.msra.mxu0 %v257
  %298 = vmatprep.subr.mxu0 0.0
  %299 = vmatpush1.msra.mxu0 %v260
  %300 = vmatprep.subr.mxu0 0.0
  %301 = vmatpush1.msra.mxu0 0.0
  %302 = vmatprep.subr.mxu0 0.0
  %303 = vmatpush1.msra.mxu0 0.0
  %304 = vmatprep.subr.mxu0 0.0
  %305 = vmatpush1.msra.mxu0 0.0
  %306 = vmatprep.subr.mxu0 0.0
  %307 = vmatpush1.msra.mxu0 0.0
  %308 = vmatprep.subr.mxu0 0.0
  %309 = vmatpush1.msra.mxu0 0.0
  %310 = vmatprep.subr.mxu0 0.0
  %311 = vmatpush1.msra.mxu0 0.0
  %312 = vmatprep.subr.mxu0 0.0
  %313 = vmatpush1.msra.mxu0 0.0
  %314 = vmatprep.subr.mxu0 0.0
  %315 = vmatpush1.msra.mxu0 0.0
  %316 = vmatprep.subr.mxu0 0.0
  %317 = vmatpush1.msra.mxu0 0.0
  %318 = vmatprep.subr.mxu0 0.0
  %319 = vmatpush1.msra.mxu0 0.0
  %320 = vmatprep.subr.mxu0 0.0
  %321 = vmatpush1.msra.mxu0 0.0
  %322 = vmatprep.subr.mxu0 0.0
  %323 = vmatpush1.msra.mxu0 0.0
  %324 = vmatprep.subr.mxu0 0.0
  %325 = vmatpush1.msra.mxu0 0.0
  %326 = vmatprep.mubr.f32.mxu0 %v51
  %327 = vmatmul.mubr.f32.gmra.mrb[0].mxu0 %v14
  %v328 = vpop.f32.mrb[0].mxu0
  %v329 = vadd.f32 %v42, %v328
  %v330 = vpop.f32.mrb[0].mxu0
  %331 = vmatprep.mubr.f32.mxu0 %v54
  %332 = vmatmul.mubr.f32.gmra.mrb[0].mxu0 %v16
  %v333 = vpop.f32.mrb[0].mxu0
  %v334 = vadd.f32 %v47, %v333
  %v335 = vpop.f32.mrb[0].mxu0
  %336 = vdwg.mxu0
  %v337 = vmax.f32 %v329, 0.0
  %v338 = vmax.f32 %v334, 0.0
  %v339 = vmax.f32 %v237, %v337
  %v340 = vmax.f32 %v238, %v338
  %s341 = scalar_lea.vmem %s0, 456
  %v342 = vld [vmem:[%s341] sm:$0xff]
  %v343 = vld [vmem:[%s341 + $0x8] sm:$0xff]
  %v344 = vld [vmem:[%s341 + $0x10] sm:$0xff]
  %v345 = vld [vmem:[%s341 + $0x18] sm:$0xff]
  %v346 = vld [vmem:[%s341 + $0x20] sm:$0xff]
  %v347 = vld [vmem:[%s341 + $0x28] sm:$0xff]
  %v348 = vld [vmem:[%s341 + $0x30] sm:$0xff]
  %v349 = vld [vmem:[%s341 + $0x38] sm:$0xff]
  %v350 = vld [vmem:[%s341 + $0x40] sm:$0xff]
  %v351 = vld [vmem:[%s341 + $0x48] sm:$0xff]
  %v352 = vld [vmem:[%s341 + $0x50] sm:$0xff]
  %v353 = vld [vmem:[%s341 + $0x58] sm:$0xff]
  %v354 = vld [vmem:[%s341 + $0x60] sm:$0xff]
  %v355 = vld [vmem:[%s341 + $0x68] sm:$0xff]
  %v356 = vld [vmem:[%s341 + $0x70] sm:$0xff]
  %v357 = vld [vmem:[%s341 + $0x78] sm:$0xff]
  %v358 = vld [vmem:[%s341 + $0x80] sm:$0xff]
  %v359 = vld [vmem:[%s341 + $0x88] sm:$0xff]
  %v360 = vld [vmem:[%s341 + $0x90] sm:$0x3f]
  %v362 = vsel %vm56, %v360, 0
  %364 = vmatprep.subr.mxu0 0.0
  %365 = vmatpush1.msra.mxu0 %v342
  %366 = vmatprep.subr.mxu0 0.0
  %367 = vmatpush1.msra.mxu0 %v343
  %368 = vmatprep.subr.mxu0 0.0
  %369 = vmatpush1.msra.mxu0 %v344
  %370 = vmatprep.subr.mxu0 0.0
  %371 = vmatpush1.msra.mxu0 %v345
  %372 = vmatprep.subr.mxu0 0.0
  %373 = vmatpush1.msra.mxu0 %v346
  %374 = vmatprep.subr.mxu0 0.0
  %375 = vmatpush1.msra.mxu0 %v347
  %376 = vmatprep.subr.mxu0 0.0
  %377 = vmatpush1.msra.mxu0 %v348
  %378 = vmatprep.subr.mxu0 0.0
  %379 = vmatpush1.msra.mxu0 %v349
  %380 = vmatprep.subr.mxu0 0.0
  %381 = vmatpush1.msra.mxu0 %v350
  %382 = vmatprep.subr.mxu0 0.0
  %383 = vmatpush1.msra.mxu0 %v351
  %384 = vmatprep.subr.mxu0 0.0
  %385 = vmatpush1.msra.mxu0 %v352
  %386 = vmatprep.subr.mxu0 0.0
  %387 = vmatpush1.msra.mxu0 %v353
  %388 = vmatprep.subr.mxu0 0.0
  %389 = vmatpush1.msra.mxu0 %v354
  %390 = vmatprep.subr.mxu0 0.0
  %391 = vmatpush1.msra.mxu0 %v355
  %392 = vmatprep.subr.mxu0 0.0
  %393 = vmatpush1.msra.mxu0 %v356
  %394 = vmatprep.subr.mxu0 0.0
  %395 = vmatpush1.msra.mxu0 %v357
  %396 = vmatprep.subr.mxu0 0.0
  %397 = vmatpush1.msra.mxu0 %v358
  %398 = vmatprep.subr.mxu0 0.0
  %399 = vmatpush1.msra.mxu0 %v359
  %400 = vmatprep.subr.mxu0 0.0
  %401 = vmatpush1.msra.mxu0 %v362
  %402 = vmatprep.subr.mxu0 0.0
  %403 = vmatpush1.msra.mxu0 0.0
  %404 = vmatprep.subr.mxu0 0.0
  %405 = vmatpush1.msra.mxu0 0.0
  %406 = vmatprep.subr.mxu0 0.0
  %407 = vmatpush1.msra.mxu0 0.0
  %408 = vmatprep.subr.mxu0 0.0
  %409 = vmatpush1.msra.mxu0 0.0
  %410 = vmatprep.subr.mxu0 0.0
  %411 = vmatpush1.msra.mxu0 0.0
  %412 = vmatprep.subr.mxu0 0.0
  %413 = vmatpush1.msra.mxu0 0.0
  %414 = vmatprep.subr.mxu0 0.0
  %415 = vmatpush1.msra.mxu0 0.0
  %416 = vmatprep.subr.mxu0 0.0
  %417 = vmatpush1.msra.mxu0 0.0
  %418 = vmatprep.subr.mxu0 0.0
  %419 = vmatpush1.msra.mxu0 0.0
  %420 = vmatprep.subr.mxu0 0.0
  %421 = vmatpush1.msra.mxu0 0.0
  %422 = vmatprep.subr.mxu0 0.0
  %423 = vmatpush1.msra.mxu0 0.0
  %424 = vmatprep.subr.mxu0 0.0
  %425 = vmatpush1.msra.mxu0 0.0
  %426 = vmatprep.subr.mxu0 0.0
  %427 = vmatpush1.msra.mxu0 0.0
  %428 = vmatprep.mubr.f32.mxu0 %v51
  %429 = vmatmul.mubr.f32.gmra.mrb[0].mxu0 %v14
  %v430 = vpop.f32.mrb[0].mxu0
  %v431 = vadd.f32 %v42, %v430
  %v432 = vpop.f32.mrb[0].mxu0
  %433 = vmatprep.mubr.f32.mxu0 %v54
  %434 = vmatmul.mubr.f32.gmra.mrb[0].mxu0 %v16
  %v435 = vpop.f32.mrb[0].mxu0
  %v436 = vadd.f32 %v47, %v435
  %v437 = vpop.f32.mrb[0].mxu0
  %438 = vdwg.mxu0
  %v439 = vmax.f32 %v431, 0.0
  %v440 = vmax.f32 %v436, 0.0
  %v441 = vmax.f32 %v339, %v439
  %v442 = vmax.f32 %v340, %v440
  %443 = vst [vmem:[%s3] sm:$0xff] %v441
  %444 = vst [vmem:[%s3 + $0x8] sm:$0xf] %v442
  // Predicated region
  $region14: #{gate_cnn_fashion_softmax.4} parent=0 // pred_check
    _
  $region15: #{gate_cnn_fashion_softmax.4} parent=0 // pred_check_branch
    %446 = sbr.rel (0) target = $region17
  $region16: #{gate_cnn_fashion_softmax.4} parent=0 // pred_region
    _
  $region17: #{gate_cnn_fashion_softmax.4} parent=0 // pred_fallthru
    _
  // Predicated region
  $region18: #{gate_cnn_fashion_softmax.4} parent=0 // pred_check
    _
  $region19: #{gate_cnn_fashion_softmax.4} parent=0 // pred_check_branch
    %448 = sbr.rel (0) target = $region21
  $region20: #{gate_cnn_fashion_softmax.4} parent=0 // pred_region
    _
  $region21: #{gate_cnn_fashion_softmax.4} parent=0 // pred_fallthru
    _

// kernel: gate_cnn_fashion_softmax.5
$region0: #{gate_cnn_fashion_softmax.5}
  #allocation0 [shape = 'u32[]', space=smem, size = 0x4, offset = 0x4, fixed_abs, tag = 'smem constant byte address 0x4 - core index']
  #allocation1 [shape = 'u32[144,128]{1,0:T(1,128)}', space=vmem, size = 0x12000, scoped, tag = 'internal scratch']
  %s0 = inlined_call_operand.vmem [shape: f32[192,128], index: 0, kind: input, shape index: {}]
  %s1 = inlined_call_operand.vmem [shape: f32[84,192], index: 1, kind: input, shape index: {}]
  %s2 = inlined_call_operand.vmem [shape: f32[84,1], index: 2, kind: input, shape index: {}]
  %s3 = inlined_call_operand.vmem [shape: f32[42,84], index: 3, kind: input, shape index: {}]
  %s4 = inlined_call_operand.vmem [shape: f32[42,1], index: 4, kind: input, shape index: {}]
  %s5 = inlined_call_operand.vmem [shape: f32[3,42], index: 5, kind: input, shape index: {}]
  %s6 = inlined_call_operand.vmem [shape: f32[3,1], index: 6, kind: input, shape index: {}]
  %s7 = inlined_call_operand.vmem [shape: f32[3,128], index: 7, kind: output, shape index: {}]
  %s8 = sld [smem:[#allocation0]]
  $region38: #{gate_cnn_fashion_softmax.5} parent=0
    _
  %s10 = ssub.s32 1, %s8
  %s11 = scalar_select 0, %s10, %s8
  // Predicated region
  $region2: #{gate_cnn_fashion_softmax.5} parent=0 // pred_check
    _
  $region3: #{gate_cnn_fashion_softmax.5} parent=0 // pred_check_branch
    %13 = sbr.rel (0) target = $region5
  $region4: #{gate_cnn_fashion_softmax.5} parent=0 // pred_region
    _
  $region5: #{gate_cnn_fashion_softmax.5} parent=0 // pred_fallthru
    _
  // Predicated region
  $region6: #{gate_cnn_fashion_softmax.5} parent=0 // pred_check
    _
  $region7: #{gate_cnn_fashion_softmax.5} parent=0 // pred_check_branch
    %15 = sbr.rel (0) target = $region9
  $region8: #{gate_cnn_fashion_softmax.5} parent=0 // pred_region
    _
  $region9: #{gate_cnn_fashion_softmax.5} parent=0 // pred_fallthru
    _
  // Predicated region
  $region10: #{gate_cnn_fashion_softmax.5} parent=0 // pred_check
    _
  $region11: #{gate_cnn_fashion_softmax.5} parent=0 // pred_check_branch
    %17 = sbr.rel (0) target = $region13
  $region12: #{gate_cnn_fashion_softmax.5} parent=0 // pred_region
    _
  $region13: #{gate_cnn_fashion_softmax.5} parent=0 // pred_fallthru
    _
  // Predicated region
  $region14: #{gate_cnn_fashion_softmax.5} parent=0 // pred_check
    _
  $region15: #{gate_cnn_fashion_softmax.5} parent=0 // pred_check_branch
    %19 = sbr.rel (0) target = $region17
  $region16: #{gate_cnn_fashion_softmax.5} parent=0 // pred_region
    _
  $region17: #{gate_cnn_fashion_softmax.5} parent=0 // pred_fallthru
    _
  // Predicated region
  $region18: #{gate_cnn_fashion_softmax.5} parent=0 // pred_check
    _
  $region19: #{gate_cnn_fashion_softmax.5} parent=0 // pred_check_branch
    %21 = sbr.rel (0) target = $region21
  $region20: #{gate_cnn_fashion_softmax.5} parent=0 // pred_region
    _
  $region21: #{gate_cnn_fashion_softmax.5} parent=0 // pred_fallthru
    _
  // Predicated region
  $region22: #{gate_cnn_fashion_softmax.5} parent=0 // pred_check
    _
  $region23: #{gate_cnn_fashion_softmax.5} parent=0 // pred_check_branch
    %23 = sbr.rel (0) target = $region25
  $region24: #{gate_cnn_fashion_softmax.5} parent=0 // pred_region
    _
  $region25: #{gate_cnn_fashion_softmax.5} parent=0 // pred_fallthru
    _
  // Predicated region
  $region26: #{gate_cnn_fashion_softmax.5} parent=0 // pred_check
    _
  $region27: #{gate_cnn_fashion_softmax.5} parent=0 // pred_check_branch
    %25 = sbr.rel (0) target = $region29
  $region28: #{gate_cnn_fashion_softmax.5} parent=0 // pred_region
    _
  $region29: #{gate_cnn_fashion_softmax.5} parent=0 // pred_fallthru
    _
  %v26 = vld [vmem:[%s1] sm:$0xff]
  %v27 = vld [vmem:[%s1 + $0x8] sm:$0xff]
  %v28 = vld [vmem:[%s1 + $0x10] sm:$0xff]
  %v29 = vld [vmem:[%s1 + $0x18] sm:$0xff]
  %v30 = vld [vmem:[%s1 + $0x20] sm:$0xff]
  %v31 = vld [vmem:[%s1 + $0x28] sm:$0xff]
  %v32 = vld [vmem:[%s1 + $0x30] sm:$0xff]
  %v33 = vld [vmem:[%s1 + $0x38] sm:$0xff]
  %v34 = vld [vmem:[%s1 + $0x40] sm:$0xff]
  %v35 = vld [vmem:[%s1 + $0x48] sm:$0xff]
  %v36 = vld [vmem:[%s1 + $0x50] sm:$0xff]
  %v37 = vld [vmem:[%s1 + $0x58] sm:$0xff]
  %v38 = vld [vmem:[%s1 + $0x60] sm:$0xff]
  %v39 = vld [vmem:[%s1 + $0x68] sm:$0xff]
  %v40 = vld [vmem:[%s1 + $0x70] sm:$0xff]
  %v41 = vld [vmem:[%s1 + $0x78] sm:$0xff]
  %v42 = vld [vmem:[%s1 + $0x80] sm:$0xff]
  %v43 = vld [vmem:[%s1 + $0x88] sm:$0xff]
  %v44 = vld [vmem:[%s1 + $0x90] sm:$0xff]
  %v45 = vld [vmem:[%s1 + $0x98] sm:$0xff]
  %v46 = vld [vmem:[%s1 + $0xa0] sm:$0xf]
  %v47 = vld [vmem:[%s1 + $0xa8] sm:$0xf]
  %v48 = vld [vmem:[%s0] sm:$0xff]
  %v49 = vld [vmem:[%s0 + $0x8] sm:$0xff]
  %v50 = vld [vmem:[%s0 + $0x10] sm:$0xff]
  %v51 = vld [vmem:[%s0 + $0x18] sm:$0xff]
  %v52 = vld [vmem:[%s0 + $0x20] sm:$0xff]
  %v53 = vld [vmem:[%s0 + $0x28] sm:$0xff]
  %v54 = vld [vmem:[%s0 + $0x30] sm:$0xff]
  %v55 = vld [vmem:[%s0 + $0x38] sm:$0xff]
  %v56 = vld [vmem:[%s0 + $0x40] sm:$0xff]
  %v57 = vld [vmem:[%s0 + $0x48] sm:$0xff]
  %v58 = vld [vmem:[%s0 + $0x50] sm:$0xff]
  %v59 = vld [vmem:[%s0 + $0x58] sm:$0xff]
  %v60 = vld [vmem:[%s0 + $0x60] sm:$0xff]
  %v61 = vld [vmem:[%s0 + $0x68] sm:$0xff]
  %v62 = vld [vmem:[%s0 + $0x70] sm:$0xff]
  %v63 = vld [vmem:[%s0 + $0x78] sm:$0xff]
  %v64 = vld [vmem:[%s0 + $0x80] sm:$0xff]
  %v65 = vld [vmem:[%s0 + $0x88] sm:$0xff]
  %v66 = vld [vmem:[%s0 + $0x90] sm:$0xff]
  %v67 = vld [vmem:[%s0 + $0x98] sm:$0xff]
  %v68 = vld [vmem:[%s0 + $0xa0] sm:$0xff]
  %v69 = vld [vmem:[%s0 + $0xa8] sm:$0xff]
  %v70 = vld [vmem:[%s0 + $0xb0] sm:$0xff]
  %v71 = vld [vmem:[%s0 + $0xb8] sm:$0xff]
  %v72 = vld [vmem:[%s2] sm:$0xff]
  %v73 = vld [vmem:[%s2 + $0x8] sm:$0xff]
  %v74 = vld [vmem:[%s2 + $0x10] sm:$0xff]
  %v75 = vld [vmem:[%s2 + $0x18] sm:$0xff]
  %v76 = vld [vmem:[%s2 + $0x20] sm:$0xff]
  %v77 = vld [vmem:[%s2 + $0x28] sm:$0xff]
  %v78 = vld [vmem:[%s2 + $0x30] sm:$0xff]
  %v79 = vld [vmem:[%s2 + $0x38] sm:$0xff]
  %v80 = vld [vmem:[%s2 + $0x40] sm:$0xff]
  %v81 = vld [vmem:[%s2 + $0x48] sm:$0xff]
  %v82 = vld [vmem:[%s2 + $0x50] sm:$0xf]
  %84 = vset.pattern.permute.xlu0 0
  %85 = vperm.xlu0 %84, %v72
  %v86 = vpop.permute.xlu0 %85
  %89 = vset.pattern.permute.xlu0 0
  %90 = vperm.xlu0 %89, %v73
  %v91 = vpop.permute.xlu0 %90
  %94 = vset.pattern.permute.xlu0 0
  %95 = vperm.xlu0 %94, %v74
  %v96 = vpop.permute.xlu0 %95
  %99 = vset.pattern.permute.xlu0 0
  %100 = vperm.xlu0 %99, %v75
  %v101 = vpop.permute.xlu0 %100
  %104 = vset.pattern.permute.xlu0 0
  %105 = vperm.xlu0 %104, %v76
  %v106 = vpop.permute.xlu0 %105
  %109 = vset.pattern.permute.xlu0 0
  %110 = vperm.xlu0 %109, %v77
  %v111 = vpop.permute.xlu0 %110
  %114 = vset.pattern.permute.xlu0 0
  %115 = vperm.xlu0 %114, %v78
  %v116 = vpop.permute.xlu0 %115
  %119 = vset.pattern.permute.xlu0 0
  %120 = vperm.xlu0 %119, %v79
  %v121 = vpop.permute.xlu0 %120
  %124 = vset.pattern.permute.xlu0 0
  %125 = vperm.xlu0 %124, %v80
  %v126 = vpop.permute.xlu0 %125
  %129 = vset.pattern.permute.xlu0 0
  %130 = vperm.xlu0 %129, %v81
  %v131 = vpop.permute.xlu0 %130
  %134 = vset.pattern.permute.xlu0 0
  %135 = vperm.xlu0 %134, %v82
  %v136 = vpop.permute.xlu0 %135
  %vm138 = vcmask 523264
  %v140 = vsel %vm138, %v27, 0
  %v143 = vsel %vm138, %v29, 0
  %v146 = vsel %vm138, %v31, 0
  %v149 = vsel %vm138, %v33, 0
  %v152 = vsel %vm138, %v35, 0
  %v155 = vsel %vm138, %v37, 0
  %v158 = vsel %vm138, %v39, 0
  %v161 = vsel %vm138, %v41, 0
  %v164 = vsel %vm138, %v43, 0
  %v167 = vsel %vm138, %v45, 0
  %v170 = vsel %vm138, %v47, 0
  %172 = vmatprep.subr.mxu0 0.0
  %173 = vmatpush1.msra.mxu0 %v48
  %174 = vmatprep.subr.mxu0 0.0
  %175 = vmatpush1.msra.mxu0 %v49
  %176 = vmatprep.subr.mxu0 0.0
  %177 = vmatpush1.msra.mxu0 %v50
  %178 = vmatprep.subr.mxu0 0.0
  %179 = vmatpush1.msra.mxu0 %v51
  %180 = vmatprep.subr.mxu0 0.0
  %181 = vmatpush1.msra.mxu0 %v52
  %182 = vmatprep.subr.mxu0 0.0
  %183 = vmatpush1.msra.mxu0 %v53
  %184 = vmatprep.subr.mxu0 0.0
  %185 = vmatpush1.msra.mxu0 %v54
  %186 = vmatprep.subr.mxu0 0.0
  %187 = vmatpush1.msra.mxu0 %v55
  %188 = vmatprep.subr.mxu0 0.0
  %189 = vmatpush1.msra.mxu0 %v56
  %190 = vmatprep.subr.mxu0 0.0
  %191 = vmatpush1.msra.mxu0 %v57
  %192 = vmatprep.subr.mxu0 0.0
  %193 = vmatpush1.msra.mxu0 %v58
  %194 = vmatprep.subr.mxu0 0.0
  %195 = vmatpush1.msra.mxu0 %v59
  %196 = vmatprep.subr.mxu0 0.0
  %197 = vmatpush1.msra.mxu0 %v60
  %198 = vmatprep.subr.mxu0 0.0
  %199 = vmatpush1.msra.mxu0 %v61
  %200 = vmatprep.subr.mxu0 0.0
  %201 = vmatpush1.msra.mxu0 %v62
  %202 = vmatprep.subr.mxu0 0.0
  %203 = vmatpush1.msra.mxu0 %v63
  %204 = vmatprep.subr.mxu0 0.0
  %205 = vmatpush1.msra.mxu0 %v64
  %206 = vmatprep.subr.mxu0 0.0
  %207 = vmatpush1.msra.mxu0 %v65
  %208 = vmatprep.subr.mxu0 0.0
  %209 = vmatpush1.msra.mxu0 %v66
  %210 = vmatprep.subr.mxu0 0.0
  %211 = vmatpush1.msra.mxu0 %v67
  %212 = vmatprep.subr.mxu0 0.0
  %213 = vmatpush1.msra.mxu0 %v68
  %214 = vmatprep.subr.mxu0 0.0
  %215 = vmatpush1.msra.mxu0 %v69
  %216 = vmatprep.subr.mxu0 0.0
  %217 = vmatpush1.msra.mxu0 %v70
  %218 = vmatprep.subr.mxu0 0.0
  %219 = vmatpush1.msra.mxu0 %v71
  %220 = vmatprep.subr.mxu0 0.0
  %221 = vmatpush1.msra.mxu0 0.0
  %222 = vmatprep.subr.mxu0 0.0
  %223 = vmatpush1.msra.mxu0 0.0
  %224 = vmatprep.subr.mxu0 0.0
  %225 = vmatpush1.msra.mxu0 0.0
  %226 = vmatprep.subr.mxu0 0.0
  %227 = vmatpush1.msra.mxu0 0.0
  %228 = vmatprep.subr.mxu0 0.0
  %229 = vmatpush1.msra.mxu0 0.0
  %230 = vmatprep.subr.mxu0 0.0
  %231 = vmatpush1.msra.mxu0 0.0
  %232 = vmatprep.subr.mxu0 0.0
  %233 = vmatpush1.msra.mxu0 0.0
  %234 = vmatprep.subr.mxu0 0.0
  %235 = vmatpush1.msra.mxu0 0.0
  %236 = vmatprep.mubr.f32.mxu0 %v140
  %237 = vmatmul.mubr.f32.gmra.mrb[0].mxu0 %v26
  %v238 = vpop.f32.mrb[0].mxu0
  %v239 = vadd.f32 %v86, %v238
  %v240 = vpop.f32.mrb[0].mxu0
  %241 = vmatprep.mubr.f32.mxu0 %v143
  %242 = vmatmul.mubr.f32.gmra.mrb[0].mxu0 %v28
  %v243 = vpop.f32.mrb[0].mxu0
  %v244 = vadd.f32 %v91, %v243
  %v245 = vpop.f32.mrb[0].mxu0
  %246 = vmatprep.mubr.f32.mxu0 %v146
  %247 = vmatmul.mubr.f32.gmra.mrb[0].mxu0 %v30
  %v248 = vpop.f32.mrb[0].mxu0
  %v249 = vadd.f32 %v96, %v248
  %v250 = vpop.f32.mrb[0].mxu0
  %251 = vmatprep.mubr.f32.mxu0 %v149
  %252 = vmatmul.mubr.f32.gmra.mrb[0].mxu0 %v32
  %v253 = vpop.f32.mrb[0].mxu0
  %v254 = vadd.f32 %v101, %v253
  %v255 = vpop.f32.mrb[0].mxu0
  %256 = vmatprep.mubr.f32.mxu0 %v152
  %257 = vmatmul.mubr.f32.gmra.mrb[0].mxu0 %v34
  %v258 = vpop.f32.mrb[0].mxu0
  %v259 = vadd.f32 %v106, %v258
  %v260 = vpop.f32.mrb[0].mxu0
  %261 = vmatprep.mubr.f32.mxu0 %v155
  %262 = vmatmul.mubr.f32.gmra.mrb[0].mxu0 %v36
  %v263 = vpop.f32.mrb[0].mxu0
  %v264 = vadd.f32 %v111, %v263
  %v265 = vpop.f32.mrb[0].mxu0
  %266 = vmatprep.mubr.f32.mxu0 %v158
  %267 = vmatmul.mubr.f32.gmra.mrb[0].mxu0 %v38
  %v268 = vpop.f32.mrb[0].mxu0
  %v269 = vadd.f32 %v116, %v268
  %v270 = vpop.f32.mrb[0].mxu0
  %271 = vmatprep.mubr.f32.mxu0 %v161
  %272 = vmatmul.mubr.f32.gmra.mrb[0].mxu0 %v40
  %v273 = vpop.f32.mrb[0].mxu0
  %v274 = vadd.f32 %v121, %v273
  %v275 = vpop.f32.mrb[0].mxu0
  %276 = vmatprep.mubr.f32.mxu0 %v164
  %277 = vmatmul.mubr.f32.gmra.mrb[0].mxu0 %v42
  %v278 = vpop.f32.mrb[0].mxu0
  %v279 = vadd.f32 %v126, %v278
  %v280 = vpop.f32.mrb[0].mxu0
  %281 = vmatprep.mubr.f32.mxu0 %v167
  %282 = vmatmul.mubr.f32.gmra.mrb[0].mxu0 %v44
  %v283 = vpop.f32.mrb[0].mxu0
  %v284 = vadd.f32 %v131, %v283
  %v285 = vpop.f32.mrb[0].mxu0
  %286 = vmatprep.mubr.f32.mxu0 %v170
  %287 = vmatmul.mubr.f32.gmra.mrb[0].mxu0 %v46
  %v288 = vpop.f32.mrb[0].mxu0
  %v289 = vadd.f32 %v136, %v288
  %v290 = vpop.f32.mrb[0].mxu0
  %291 = vdwg.mxu0
  %v292 = vmax.f32 %v239, 0.0
  %v293 = vmax.f32 %v244, 0.0
  %v294 = vmax.f32 %v249, 0.0
  %v295 = vmax.f32 %v254, 0.0
  %v296 = vmax.f32 %v259, 0.0
  %v297 = vmax.f32 %v264, 0.0
  %v298 = vmax.f32 %v269, 0.0
  %v299 = vmax.f32 %v274, 0.0
  %v300 = vmax.f32 %v279, 0.0
  %v301 = vmax.f32 %v284, 0.0
  %v302 = vmax.f32 %v289, 0.0
  %v303 = vld [vmem:[%s3] sm:$0xff]
  %v304 = vld [vmem:[%s3 + $0x8] sm:$0xff]
  %v305 = vld [vmem:[%s3 + $0x10] sm:$0xff]
  %v306 = vld [vmem:[%s3 + $0x18] sm:$0xff]
  %v307 = vld [vmem:[%s3 + $0x20] sm:$0xff]
  %v308 = vld [vmem:[%s3 + $0x28] sm:$0x3]
  %v309 = vld [vmem:[%s4] sm:$0xff]
  %v310 = vld [vmem:[%s4 + $0x8] sm:$0xff]
  %v311 = vld [vmem:[%s4 + $0x10] sm:$0xff]
  %v312 = vld [vmem:[%s4 + $0x18] sm:$0xff]
  %v313 = vld [vmem:[%s4 + $0x20] sm:$0xff]
  %v314 = vld [vmem:[%s4 + $0x28] sm:$0x3]
  %316 = vset.pattern.permute.xlu0 0
  %317 = vperm.xlu0 %316, %v309
  %v318 = vpop.permute.xlu0 %317
  %321 = vset.pattern.permute.xlu0 0
  %322 = vperm.xlu0 %321, %v310
  %v323 = vpop.permute.xlu0 %322
  %326 = vset.pattern.permute.xlu0 0
  %327 = vperm.xlu0 %326, %v311
  %v328 = vpop.permute.xlu0 %327
  %331 = vset.pattern.permute.xlu0 0
  %332 = vperm.xlu0 %331, %v312
  %v333 = vpop.permute.xlu0 %332
  %336 = vset.pattern.permute.xlu0 0
  %337 = vperm.xlu0 %336, %v313
  %v338 = vpop.permute.xlu0 %337
  %341 = vset.pattern.permute.xlu0 0
  %342 = vperm.xlu0 %341, %v314
  %v343 = vpop.permute.xlu0 %342
  %vm345 = vcmask 687104
  %v347 = vsel %vm345, %v303, 0
  %v350 = vsel %vm345, %v304, 0
  %v353 = vsel %vm345, %v305, 0
  %v356 = vsel %vm345, %v306, 0
  %v359 = vsel %vm345, %v307, 0
  %v362 = vsel %vm345, %v308, 0
  %vm364 = vcmask 1043456
  %v366 = vsel %vm364, %v302, 0
  %368 = vmatprep.subr.mxu0 0.0
  %369 = vmatpush1.msra.mxu0 %v292
  %370 = vmatprep.subr.mxu0 0.0
  %371 = vmatpush1.msra.mxu0 %v293
  %372 = vmatprep.subr.mxu0 0.0
  %373 = vmatpush1.msra.mxu0 %v294
  %374 = vmatprep.subr.mxu0 0.0
  %375 = vmatpush1.msra.mxu0 %v295
  %376 = vmatprep.subr.mxu0 0.0
  %377 = vmatpush1.msra.mxu0 %v296
  %378 = vmatprep.subr.mxu0 0.0
  %379 = vmatpush1.msra.mxu0 %v297
  %380 = vmatprep.subr.mxu0 0.0
  %381 = vmatpush1.msra.mxu0 %v298
  %382 = vmatprep.subr.mxu0 0.0
  %383 = vmatpush1.msra.mxu0 %v299
  %384 = vmatprep.subr.mxu0 0.0
  %385 = vmatpush1.msra.mxu0 %v300
  %386 = vmatprep.subr.mxu0 0.0
  %387 = vmatpush1.msra.mxu0 %v301
  %388 = vmatprep.subr.mxu0 0.0
  %389 = vmatpush1.msra.mxu0 %v366
  %390 = vmatprep.subr.mxu0 0.0
  %391 = vmatpush1.msra.mxu0 0.0
  %392 = vmatprep.subr.mxu0 0.0
  %393 = vmatpush1.msra.mxu0 0.0
  %394 = vmatprep.subr.mxu0 0.0
  %395 = vmatpush1.msra.mxu0 0.0
  %396 = vmatprep.subr.mxu0 0.0
  %397 = vmatpush1.msra.mxu0 0.0
  %398 = vmatprep.subr.mxu0 0.0
  %399 = vmatpush1.msra.mxu0 0.0
  %400 = vmatprep.subr.mxu0 0.0
  %401 = vmatpush1.msra.mxu0 0.0
  %402 = vmatprep.subr.mxu0 0.0
  %403 = vmatpush1.msra.mxu0 0.0
  %404 = vmatprep.subr.mxu0 0.0
  %405 = vmatpush1.msra.mxu0 0.0
  %406 = vmatprep.subr.mxu0 0.0
  %407 = vmatpush1.msra.mxu0 0.0
  %408 = vmatprep.subr.mxu0 0.0
  %409 = vmatpush1.msra.mxu0 0.0
  %410 = vmatprep.subr.mxu0 0.0
  %411 = vmatpush1.msra.mxu0 0.0
  %412 = vmatprep.subr.mxu0 0.0
  %413 = vmatpush1.msra.mxu0 0.0
  %414 = vmatprep.subr.mxu0 0.0
  %415 = vmatpush1.msra.mxu0 0.0
  %416 = vmatprep.subr.mxu0 0.0
  %417 = vmatpush1.msra.mxu0 0.0
  %418 = vmatprep.subr.mxu0 0.0
  %419 = vmatpush1.msra.mxu0 0.0
  %420 = vmatprep.subr.mxu0 0.0
  %421 = vmatpush1.msra.mxu0 0.0
  %422 = vmatprep.subr.mxu0 0.0
  %423 = vmatpush1.msra.mxu0 0.0
  %424 = vmatprep.subr.mxu0 0.0
  %425 = vmatpush1.msra.mxu0 0.0
  %426 = vmatprep.subr.mxu0 0.0
  %427 = vmatpush1.msra.mxu0 0.0
  %428 = vmatprep.subr.mxu0 0.0
  %429 = vmatpush1.msra.mxu0 0.0
  %430 = vmatprep.subr.mxu0 0.0
  %431 = vmatpush1.msra.mxu0 0.0
  %432 = vmatprep.mubr.f32.mxu0 0.0
  %433 = vmatmul.mubr.f32.gmra.mrb[0].mxu0 %v347
  %v434 = vpop.f32.mrb[0].mxu0
  %v435 = vadd.f32 %v318, %v434
  %v436 = vpop.f32.mrb[0].mxu0
  %437 = vmatprep.mubr.f32.mxu0 0.0
  %438 = vmatmul.mubr.f32.gmra.mrb[0].mxu0 %v350
  %v439 = vpop.f32.mrb[0].mxu0
  %v440 = vadd.f32 %v323, %v439
  %v441 = vpop.f32.mrb[0].mxu0
  %442 = vmatprep.mubr.f32.mxu0 0.0
  %443 = vmatmul.mubr.f32.gmra.mrb[0].mxu0 %v353
  %v444 = vpop.f32.mrb[0].mxu0
  %v445 = vadd.f32 %v328, %v444
  %v446 = vpop.f32.mrb[0].mxu0
  %447 = vmatprep.mubr.f32.mxu0 0.0
  %448 = vmatmul.mubr.f32.gmra.mrb[0].mxu0 %v356
  %v449 = vpop.f32.mrb[0].mxu0
  %v450 = vadd.f32 %v333, %v449
  %v451 = vpop.f32.mrb[0].mxu0
  %452 = vmatprep.mubr.f32.mxu0 0.0
  %453 = vmatmul.mubr.f32.gmra.mrb[0].mxu0 %v359
  %v454 = vpop.f32.mrb[0].mxu0
  %v455 = vadd.f32 %v338, %v454
  %v456 = vpop.f32.mrb[0].mxu0
  %457 = vmatprep.mubr.f32.mxu0 0.0
  %458 = vmatmul.mubr.f32.gmra.mrb[0].mxu0 %v362
  %v459 = vpop.f32.mrb[0].mxu0
  %v460 = vadd.f32 %v343, %v459
  %v461 = vpop.f32.mrb[0].mxu0
  %462 = vdwg.mxu0
  %v463 = vmax.f32 %v435, 0.0
  %v464 = vmax.f32 %v440, 0.0
  %v465 = vmax.f32 %v445, 0.0
  %v466 = vmax.f32 %v450, 0.0
  %v467 = vmax.f32 %v455, 0.0
  %v468 = vmax.f32 %v460, 0.0
  %v469 = vld [vmem:[%s5] sm:$0x7]
  %v470 = vld [vmem:[%s6] sm:$0x7]
  %472 = vset.pattern.permute.xlu0 0
  %473 = vperm.xlu0 %472, %v470
  %v474 = vpop.permute.xlu0 %473
  %vm476 = vcmask 343040
  %v478 = vsel %vm476, %v469, 0
  %vm480 = vcmask 1041408
  %v482 = vsel %vm480, %v468, 0
  %484 = vmatprep.subr.mxu0 0.0
  %485 = vmatpush1.msra.mxu0 %v463
  %486 = vmatprep.subr.mxu0 0.0
  %487 = vmatpush1.msra.mxu0 %v464
  %488 = vmatprep.subr.mxu0 0.0
  %489 = vmatpush1.msra.mxu0 %v465
  %490 = vmatprep.subr.mxu0 0.0
  %491 = vmatpush1.msra.mxu0 %v466
  %492 = vmatprep.subr.mxu0 0.0
  %493 = vmatpush1.msra.mxu0 %v467
  %494 = vmatprep.subr.mxu0 0.0
  %495 = vmatpush1.msra.mxu0 %v482
  %496 = vmatprep.subr.mxu0 0.0
  %497 = vmatpush1.msra.mxu0 0.0
  %498 = vmatprep.subr.mxu0 0.0
  %499 = vmatpush1.msra.mxu0 0.0
  %500 = vmatprep.subr.mxu0 0.0
  %501 = vmatpush1.msra.mxu0 0.0
  %502 = vmatprep.subr.mxu0 0.0
  %503 = vmatpush1.msra.mxu0 0.0
  %504 = vmatprep.subr.mxu0 0.0
  %505 = vmatpush1.msra.mxu0 0.0
  %506 = vmatprep.subr.mxu0 0.0
  %507 = vmatpush1.msra.mxu0 0.0
  %508 = vmatprep.subr.mxu0 0.0
  %509 = vmatpush1.msra.mxu0 0.0
  %510 = vmatprep.subr.mxu0 0.0
  %511 = vmatpush1.msra.mxu0 0.0
  %512 = vmatprep.subr.mxu0 0.0
  %513 = vmatpush1.msra.mxu0 0.0
  %514 = vmatprep.subr.mxu0 0.0
  %515 = vmatpush1.msra.mxu0 0.0
  %516 = vmatprep.subr.mxu0 0.0
  %517 = vmatpush1.msra.mxu0 0.0
  %518 = vmatprep.subr.mxu0 0.0
  %519 = vmatpush1.msra.mxu0 0.0
  %520 = vmatprep.subr.mxu0 0.0
  %521 = vmatpush1.msra.mxu0 0.0
  %522 = vmatprep.subr.mxu0 0.0
  %523 = vmatpush1.msra.mxu0 0.0
  %524 = vmatprep.subr.mxu0 0.0
  %525 = vmatpush1.msra.mxu0 0.0
  %526 = vmatprep.subr.mxu0 0.0
  %527 = vmatpush1.msra.mxu0 0.0
  %528 = vmatprep.subr.mxu0 0.0
  %529 = vmatpush1.msra.mxu0 0.0
  %530 = vmatprep.subr.mxu0 0.0
  %531 = vmatpush1.msra.mxu0 0.0
  %532 = vmatprep.subr.mxu0 0.0
  %533 = vmatpush1.msra.mxu0 0.0
  %534 = vmatprep.subr.mxu0 0.0
  %535 = vmatpush1.msra.mxu0 0.0
  %536 = vmatprep.subr.mxu0 0.0
  %537 = vmatpush1.msra.mxu0 0.0
  %538 = vmatprep.subr.mxu0 0.0
  %539 = vmatpush1.msra.mxu0 0.0
  %540 = vmatprep.subr.mxu0 0.0
  %541 = vmatpush1.msra.mxu0 0.0
  %542 = vmatprep.subr.mxu0 0.0
  %543 = vmatpush1.msra.mxu0 0.0
  %544 = vmatprep.subr.mxu0 0.0
  %545 = vmatpush1.msra.mxu0 0.0
  %546 = vmatprep.subr.mxu0 0.0
  %547 = vmatpush1.msra.mxu0 0.0
  %548 = vmatprep.mubr.f32.mxu0 0.0
  %549 = vmatmul.mubr.f32.gmra.mrb[0].mxu0 %v478
  %v550 = vpop.f32.mrb[0].mxu0
  %v551 = vadd.f32 %v474, %v550
  %v552 = vpop.f32.mrb[0].mxu0
  %553 = vdwg.mxu0
  %v555 = vrot.slane %v551, 1
  %v557 = vmax.f32 %v551, %v555
  %v558 = vrot.slane %v551, 2
  %v560 = vmax.f32 %v557, %v558
  %v561 = vsub.f32 %v551, %v560
  %v562 = vmul.f32 %v561, 1.442695
  %v563 = vpow.pop %v562
  %v565 = vrot.slane %v560, 7
  %v567 = vsub.f32 %v551, %v565
  %v568 = vmul.f32 %v567, 1.442695
  %v569 = vpow.pop %v568
  %v570 = vrot.slane %v560, 6
  %v572 = vsub.f32 %v551, %v570
  %v573 = vmul.f32 %v572, 1.442695
  %v574 = vpow.pop %v573
  %v576 = vrot.slane %v569, 1
  %v578 = vadd.f32 %v563, %v576
  %v580 = vrot.slane %v574, 2
  %v582 = vadd.f32 %v578, %v580
  %v583 = vrcp.pop %v582
  %v584 = vmul.f32 1.0, %v583
  %v585 = vmul.f32 %v563, %v584
  %586 = vst [vmem:[%s7] sm:$0x1] %v585
  %v588 = vrot.slane %v584, 7
  %v590 = vmul.f32 %v569, %v588
  %591 = vst [vmem:[%s7] sm:$0x2] %v590
  %v592 = vrot.slane %v584, 6
  %v594 = vmul.f32 %v574, %v592
  %595 = vst [vmem:[%s7] sm:$0x4] %v594
  // Predicated region
  $region30: #{gate_cnn_fashion_softmax.5} parent=0 // pred_check
    _
  $region31: #{gate_cnn_fashion_softmax.5} parent=0 // pred_check_branch
    %597 = sbr.rel (0) target = $region33
  $region32: #{gate_cnn_fashion_softmax.5} parent=0 // pred_region
    _
  $region33: #{gate_cnn_fashion_softmax.5} parent=0 // pred_fallthru
    _
  // Predicated region
  $region34: #{gate_cnn_fashion_softmax.5} parent=0 // pred_check
    _
  $region35: #{gate_cnn_fashion_softmax.5} parent=0 // pred_check_branch
    %599 = sbr.rel (0) target = $region37
  $region36: #{gate_cnn_fashion_softmax.5} parent=0 // pred_region
    _
  $region37: #{gate_cnn_fashion_softmax.5} parent=0 // pred_fallthru
    _

</llo_original>
